<compile_context>
chip_gen: v5e
topology: v5e:2x2
jax: 0.10.0
libtpu: 0.0.40
codegen_flags: <defaults>
</compile_context>

<pallas_src>
import functools

import jax
import jax.numpy as jnp
from jax.experimental import pallas as pl
from jax.experimental.pallas import tpu as pltpu

_MIB = 1024 * 1024


def _round_up(x, m):
    return (x + m - 1) // m * m


# ----------------------------------------------------------------------------
# Kernel body
# ----------------------------------------------------------------------------
def _llama_mlp_kernel(x_ref, wgu_ref, wd_ref, o_ref, acc_ref, *, ti):
    # x_ref:   (tm, E)      bf16 row tile
    # wgu_ref: (E, 2*ti)    [gate slab | up slab] for this I-tile, bf16
    # wd_ref:  (ti, E)      down_proj slab for this I-tile, bf16
    # o_ref:   (tm, E)      output tile
    # acc_ref: (tm, E)      f32 accumulator, resident across the I axis
    ii = pl.program_id(1)

    @pl.when(ii == 0)
    def _():
        acc_ref[...] = jnp.zeros_like(acc_ref)

    x = x_ref[...]
    # One MXU pass for gate+up: (tm, E) @ (E, 2*ti) -> f32.
    gu = jnp.dot(x, wgu_ref[...], preferred_element_type=jnp.float32)
    g = gu[:, :ti]
    u = gu[:, ti:]
    # SiLU(gate) * up in f32 (EUP sigmoid + VPU muls).
    h = (g * jax.nn.sigmoid(g)) * u
    # Down-proj partial sum for this I-slice, accumulated in f32.
    acc_ref[...] += jnp.dot(h.astype(wd_ref.dtype), wd_ref[...],
                            preferred_element_type=jnp.float32)

    @pl.when(ii == pl.num_programs(1) - 1)
    def _():
        o_ref[...] = acc_ref[...].astype(o_ref.dtype)


# ----------------------------------------------------------------------------
# Generation-aware tile / VMEM configuration
# ----------------------------------------------------------------------------
def _tpu_generation():
    try:
        kind = jax.devices()[0].device_kind.lower()
    except Exception:
        return None
    for tag in ("v7", "v6", "v5"):
        if tag in kind:
            return tag
    return None


def auto_config(M, E, I, out_bytes, *, tm=None, ti=None,
                vmem_limit_bytes=None, weight_buffers=2):
    """Pick (tm, ti, vmem_limit_bytes) for the current TPU generation."""
    gen = _tpu_generation()
    if gen == "v7":                       # 2 TCs, 64 MiB VMEM/TC, ridge ~310 F/B
        tm_max, ti_def, vmem_lim = 512, (256 if E >= 6144 else 512), 56 * _MIB
    elif gen == "v6":                     # ridge ~650 FLOP/byte, 128 MiB VMEM
        tm_max, ti_def, vmem_lim = 512, 512, 100 * _MIB
    elif gen == "v5":                     # ridge ~240 FLOP/byte -> tm=256 enough
        tm_max, ti_def, vmem_lim = 256, 512, 100 * _MIB
    else:                                 # unknown: conservative, always fits
        tm_max, ti_def, vmem_lim = 256, 512, 56 * _MIB

    if ti is None:
        ti = ti_def
    ti = max(128, min(ti, _round_up(I, 128)))

    if tm is None:
        tm = tm_max
    tm = max(128, min(tm, _round_up(M, 128)))

    # Prefer a tm that divides M exactly (avoids pad / output-slice copies).
    if M % 128 == 0 and M % tm != 0:
        for cand in range(tm, 127, -128):
            if M % cand == 0:
                tm = cand
                break

    # v7x megacore: make sure the "parallel" M axis has >= 2 tiles.
    if gen == "v7" and tm > 128 and _round_up(M, tm) // tm < 2:
        tm = max(128, _round_up(-(-M // 2), 128))

    # VMEM fit estimate (double-buffered x/out, weight_buffers-deep weights,
    # resident f32 accumulator); shrink ti then tm if necessary.
    def vmem_estimate(tm_, ti_):
        x_b = 2 * tm_ * E * 2
        wgu_b = weight_buffers * E * (2 * ti_) * 2
        wd_b = weight_buffers * ti_ * E * 2
        out_b = 2 * tm_ * E * out_bytes
        acc_b = tm_ * E * 4
        return x_b + wgu_b + wd_b + out_b + acc_b

    budget = int(vmem_lim * 0.9)          # headroom for Mosaic internal scratch
    while vmem_estimate(tm, ti) > budget and ti > 256:
        ti = max(256, (ti // 2) // 128 * 128)
    while vmem_estimate(tm, ti) > budget and tm > 128:
        tm = max(128, (tm // 2) // 128 * 128)

    if vmem_limit_bytes is None:
        vmem_limit_bytes = vmem_lim
    return tm, ti, vmem_limit_bytes


# ----------------------------------------------------------------------------
# One-time weight packing (call at init, NOT per forward)
# ----------------------------------------------------------------------------
def pack_llama_mlp_weights(wg, wu, wd, *, ti, compute_dtype=jnp.bfloat16):
    """Re-layout weights once.

    wg, wu : (I, E)  gate/up PyTorch (out, in) layout
    wd     : (E, I)  down_proj PyTorch layout
    Returns
      wgu  : (E, 2*Ip)  per-I-tile [gate_ii | up_ii] slabs, compute_dtype
      wd_t : (Ip, E)    down_proj transposed+padded, compute_dtype
    Zero padding of I is exact: silu(0)*0 = 0 and padded down rows are zero.
    """
    I, E = wg.shape
    Ip = _round_up(I, ti)
    n_ti = Ip // ti

    wg_t = wg.T.astype(compute_dtype)   # (E, I)
    wu_t = wu.T.astype(compute_dtype)   # (E, I)
    wd_t = wd.T.astype(compute_dtype)   # (I, E)
    if Ip != I:
        wg_t = jnp.pad(wg_t, ((0, 0), (0, Ip - I)))
        wu_t = jnp.pad(wu_t, ((0, 0), (0, Ip - I)))
        wd_t = jnp.pad(wd_t, ((0, Ip - I), (0, 0)))

    wgu = jnp.concatenate(
        [wg_t.reshape(E, n_ti, ti), wu_t.reshape(E, n_ti, ti)], axis=2
    ).reshape(E, 2 * Ip)
    return wgu, wd_t


# ----------------------------------------------------------------------------
# Forward on pre-packed weights (hot path)
# ----------------------------------------------------------------------------
def llama_mlp_packed(x, wgu, wd_t, *, tm, ti, vmem_limit_bytes,
                     weight_buffers=2, out_dtype=None):
    B, T, E = x.shape
    Ip = wd_t.shape[0]
    n_ti = Ip // ti
    M = B * T
    compute_dtype = wgu.dtype
    out_dtype = x.dtype if out_dtype is None else out_dtype

    Mp = _round_up(M, tm)
    x2 = x.reshape(M, E)
    if x2.dtype != compute_dtype:
        x2 = x2.astype(compute_dtype)
    if Mp != M:
        x2 = jnp.pad(x2, ((0, Mp - M), (0, 0)))

    kernel = functools.partial(_llama_mlp_kernel, ti=ti)

    # Optional deeper pipelining of the weight streams (v5e/v6e headroom).
    w_kwargs = {}
    if weight_buffers != 2:
        w_kwargs = dict(pipeline_mode=pl.Buffered(weight_buffers))

    out = pl.pallas_call(
        kernel,
        out_shape=jax.ShapeDtypeStruct((Mp, E), out_dtype),
        grid_spec=pltpu.PrefetchScalarGridSpec(
            num_scalar_prefetch=0,
            grid=(Mp // tm, n_ti),                               # I axis last
            in_specs=[
                pl.BlockSpec((tm, E), lambda i, ii: (i, 0)),               # x
                pl.BlockSpec((E, 2 * ti), lambda i, ii: (0, ii), **w_kwargs),  # [g|u]
                pl.BlockSpec((ti, E), lambda i, ii: (ii, 0), **w_kwargs),      # down
            ],
            out_specs=pl.BlockSpec((tm, E), lambda i, ii: (i, 0)),
            scratch_shapes=[pltpu.VMEM((tm, E), jnp.float32)],
        ),
        compiler_params=pltpu.CompilerParams(
            dimension_semantics=("parallel", "arbitrary"),
            vmem_limit_bytes=vmem_limit_bytes,
        ),
    )(x2, wgu, wd_t)

    if Mp != M:
        out = out[:M]
    return out.reshape(B, T, E)


# ----------------------------------------------------------------------------
# Convenience wrapper from PyTorch-layout weights (packs on the fly).
# For production, call pack_llama_mlp_weights once at init instead.
# ----------------------------------------------------------------------------
def llama_mlp(x, wg, wu, wd, *, tm=None, ti=None, compute_dtype=jnp.bfloat16,
              out_dtype=None, vmem_limit_bytes=None, weight_buffers=2):
    B, T, E = x.shape
    I = wg.shape[0]
    out_dt = x.dtype if out_dtype is None else out_dtype
    tm, ti, vmem_limit_bytes = auto_config(
        B * T, E, I, jnp.dtype(out_dt).itemsize,
        tm=tm, ti=ti, vmem_limit_bytes=vmem_limit_bytes,
        weight_buffers=weight_buffers)
    wgu, wd_t = pack_llama_mlp_weights(wg, wu, wd, ti=ti,
                                       compute_dtype=compute_dtype)
    return llama_mlp_packed(x, wgu, wd_t, tm=tm, ti=ti,
                            vmem_limit_bytes=vmem_limit_bytes,
                            weight_buffers=weight_buffers,
                            out_dtype=out_dtype)


if __name__ == "__main__":
    # Small config: n_embd=128, intermediate_size=256, batch=2, seq=8.
    B, T, E, I = 2, 8, 128, 256

    key = jax.random.PRNGKey(0)
    kx, kg, ku, kd = jax.random.split(key, 4)

    x = jax.random.normal(kx, (B, T, E), dtype=jnp.float32)

    # PyTorch-style uniform(-1/sqrt(fan_in), 1/sqrt(fan_in)) init.
    def init_linear(k, out_f, in_f):
        bound = 1.0 / (in_f ** 0.5)
        return jax.random.uniform(k, (out_f, in_f), jnp.float32, -bound, bound)

    wg = init_linear(kg, I, E)   # gate_proj.weight  (I, E)
    wu = init_linear(ku, I, E)   # up_proj.weight    (I, E)
    wd = init_linear(kd, E, I)   # down_proj.weight  (E, I)

    # Exercise the production path: pack once, then run the packed forward.
    tm, ti, vmem_lim = auto_config(B * T, E, I, jnp.dtype(x.dtype).itemsize)
    wgu, wd_t = pack_llama_mlp_weights(wg, wu, wd, ti=ti)
    y = llama_mlp_packed(x, wgu, wd_t, tm=tm, ti=ti, vmem_limit_bytes=vmem_lim)
    y = jax.block_until_ready(y)

    # Pure-JAX f32 reference (bf16 MXU operands => loose tolerance).
    g_ref = x @ wg.T
    u_ref = x @ wu.T
    y_ref = (g_ref * jax.nn.sigmoid(g_ref) * u_ref) @ wd.T

    assert y.shape == (B, T, E)
    err = float(jnp.max(jnp.abs(y - y_ref)))
    assert err < 2e-2, f"mismatch vs reference: max abs err {err}"

    print("KERNEL_OK")
</pallas_src>

<mosaic_0001>
module attributes {stable_mosaic.version = 11 : i64} {
  func.func @_llama_mlp_kernel(%arg0: i32, %arg1: i32, %arg2: memref<128x128xbf16, #tpu.memory_space<vmem>>, %arg3: memref<128x512xbf16, #tpu.memory_space<vmem>>, %arg4: memref<256x128xbf16, #tpu.memory_space<vmem>>, %arg5: memref<128x128xf32, #tpu.memory_space<vmem>>, %arg6: memref<128x128xf32, #tpu.memory_space<vmem>>) attributes {dimension_semantics = [#tpu.dimension_semantics<parallel>, #tpu.dimension_semantics<arbitrary>], iteration_bounds = array<i64: 1, 1>, scalar_prefetch = 0 : i64, scratch_operands = 1 : i64, tpu.core_type = #tpu.core_type<tc>, window_params = [{transform_indices = @transform_0, window_bounds = array<i64: 128, 128>}, {transform_indices = @transform_1, window_bounds = array<i64: 128, 512>}, {transform_indices = @transform_2, window_bounds = array<i64: 256, 128>}, {transform_indices = @transform_3, window_bounds = array<i64: 128, 128>}]} {
    %c0_i32 = arith.constant 0 : i32
    %0 = arith.cmpi eq, %arg1, %c0_i32 : i32
    %1 = arith.extui %0 : i1 to i32
    %c0_i32_0 = arith.constant 0 : i32
    %2 = arith.cmpi ne, %1, %c0_i32_0 : i32
    scf.if %2 {
      %cst_14 = arith.constant 0.000000e+00 : f32
      %24 = vector.broadcast %cst_14 : f32 to vector<128x128xf32>
      %c0_15 = arith.constant 0 : index
      %c0_16 = arith.constant 0 : index
      %25 = vector.load %arg6[%c0_15, %c0_16] : memref<128x128xf32, #tpu.memory_space<vmem>>, vector<128x128xf32>
      tpu.vector_store %arg6[%c0_15, %c0_16], %24 {strides = array<i32>} : memref<128x128xf32, #tpu.memory_space<vmem>>, vector<128x128xf32>,
    } else {
    }
    %c0 = arith.constant 0 : index
    %c0_1 = arith.constant 0 : index
    %3 = vector.load %arg2[%c0, %c0_1] : memref<128x128xbf16, #tpu.memory_space<vmem>>, vector<128x128xbf16>
    %c0_2 = arith.constant 0 : index
    %c0_3 = arith.constant 0 : index
    %4 = vector.load %arg3[%c0_2, %c0_3] : memref<128x512xbf16, #tpu.memory_space<vmem>>, vector<128x512xbf16>
    %cst = arith.constant dense<0.000000e+00> : vector<128x512xf32>
    %5 = tpu.matmul %3, %4, %cst {dimension_numbers = #tpu.dot_dimension_numbers<[1], [0], [0], [1], [0, 0, 1, 1], [], []>} : vector<128x128xbf16>, vector<128x512xbf16>, vector<128x512xf32> -> vector<128x512xf32>
    %6 = vector.extract_strided_slice %5 {offsets = [0, 0], sizes = [128, 256], strides = [1, 1]} : vector<128x512xf32> to vector<128x256xf32>
    %7 = vector.extract_strided_slice %5 {offsets = [0, 256], sizes = [128, 256], strides = [1, 1]} : vector<128x512xf32> to vector<128x256xf32>
    %8 = arith.negf %6 : vector<128x256xf32>
    %9 = math.exp %8 : vector<128x256xf32>
    %cst_4 = arith.constant 1.000000e+00 : f32
    %10 = vector.broadcast %cst_4 : f32 to vector<128x256xf32>
    %11 = arith.addf %10, %9 : vector<128x256xf32>
    %12 = arith.divf %10, %11 : vector<128x256xf32>
    %13 = arith.mulf %6, %12 : vector<128x256xf32>
    %14 = arith.mulf %13, %7 : vector<128x256xf32>
    %c0_5 = arith.constant 0 : index
    %c0_6 = arith.constant 0 : index
    %15 = vector.load %arg6[%c0_5, %c0_6] : memref<128x128xf32, #tpu.memory_space<vmem>>, vector<128x128xf32>
    %16 = arith.truncf %14 : vector<128x256xf32> to vector<128x256xbf16>
    %c0_7 = arith.constant 0 : index
    %c0_8 = arith.constant 0 : index
    %17 = vector.load %arg4[%c0_7, %c0_8] : memref<256x128xbf16, #tpu.memory_space<vmem>>, vector<256x128xbf16>
    %cst_9 = arith.constant dense<0.000000e+00> : vector<128x128xf32>
    %18 = tpu.matmul %16, %17, %cst_9 {dimension_numbers = #tpu.dot_dimension_numbers<[1], [0], [0], [1], [0, 0, 1, 1], [], []>} : vector<128x256xbf16>, vector<256x128xbf16>, vector<128x128xf32> -> vector<128x128xf32>
    %19 = arith.addf %15, %18 : vector<128x128xf32>
    %c0_10 = arith.constant 0 : index
    %c0_11 = arith.constant 0 : index
    %20 = vector.load %arg6[%c0_10, %c0_11] : memref<128x128xf32, #tpu.memory_space<vmem>>, vector<128x128xf32>
    tpu.vector_store %arg6[%c0_10, %c0_11], %19 {strides = array<i32>} : memref<128x128xf32, #tpu.memory_space<vmem>>, vector<128x128xf32>,
    %c0_i32_12 = arith.constant 0 : i32
    %21 = arith.cmpi eq, %arg1, %c0_i32_12 : i32
    %22 = arith.extui %21 : i1 to i32
    %c0_i32_13 = arith.constant 0 : i32
    %23 = arith.cmpi ne, %22, %c0_i32_13 : i32
    scf.if %23 {
      %c0_14 = arith.constant 0 : index
      %c0_15 = arith.constant 0 : index
      %24 = vector.load %arg6[%c0_14, %c0_15] : memref<128x128xf32, #tpu.memory_space<vmem>>, vector<128x128xf32>
      %c0_16 = arith.constant 0 : index
      %c0_17 = arith.constant 0 : index
      %25 = vector.load %arg5[%c0_16, %c0_17] : memref<128x128xf32, #tpu.memory_space<vmem>>, vector<128x128xf32>
      tpu.vector_store %arg5[%c0_16, %c0_17], %24 {strides = array<i32>} : memref<128x128xf32, #tpu.memory_space<vmem>>, vector<128x128xf32>,
    } else {
    }
    return
  }
  func.func @transform_0(%arg0: i32, %arg1: i32) -> (i32, i32) {
    %c0_i32 = arith.constant 0 : i32
    %c0_i32_0 = arith.constant 0 : i32
    return %arg0, %c0_i32 : i32, i32
  }
  func.func @transform_1(%arg0: i32, %arg1: i32) -> (i32, i32) {
    %c0_i32 = arith.constant 0 : i32
    %c0_i32_0 = arith.constant 0 : i32
    return %c0_i32, %arg1 : i32, i32
  }
  func.func @transform_2(%arg0: i32, %arg1: i32) -> (i32, i32) {
    %c0_i32 = arith.constant 0 : i32
    %c0_i32_0 = arith.constant 0 : i32
    return %arg1, %c0_i32 : i32, i32
  }
  func.func @transform_3(%arg0: i32, %arg1: i32) -> (i32, i32) {
    %c0_i32 = arith.constant 0 : i32
    %c0_i32_0 = arith.constant 0 : i32
    return %arg0, %c0_i32 : i32, i32
  }
}

</mosaic_0001>

<llo_original>
// kernel: tpu_custom_call.1
$region0: #{tpu_custom_call.1}
  #allocation0 [shape = 'u32[]', space=smem, size = 0x4, offset = 0x4, fixed_abs, tag = 'smem constant byte address 0x4 - core index']
  #allocation1 [shape = 'u32[72,128]{1,0:T(1,128)}', space=vmem, size = 0x9000, scoped, tag = 'internal scratch']
  #allocation2 [shape = 'f32[128,128]{1,0:T(8,128)}', space=vmem, size = 0x10000, scoped, tag = 'scratch operand']
  %s0 = inlined_call_operand.hbm [shape: bf16[128,128], index: 0, kind: input, shape index: {}]
  %s1 = inlined_call_operand.hbm [shape: bf16[128,512], index: 1, kind: input, shape index: {}]
  %s2 = inlined_call_operand.hbm [shape: bf16[256,128], index: 2, kind: input, shape index: {}]
  %s3 = inlined_call_operand.hbm [shape: f32[128,128], index: 3, kind: output, shape index: {}]
  %s4 = sld [smem:[#allocation0]]
  $region42: #{tpu_custom_call.1} parent=0
    _
  %s6 = ssub.s32 1, %s4
  %s7 = scalar_select 0, %s6, %s4
  $region1: #{tpu_custom_call.1} parent=0
    #allocation3 [shape = 'u8[32768]{0}', space=vmem, size = 0x8000, scoped, tag = 'input window, operand 0, single buffered']
    #allocation4 [shape = 's32[1]{0}', space=sflag, size = 0x4, scoped, tag = 'scoped memory for tpu_custom_call.1']
    #allocation5 [shape = 's32[1]{0}', space=sflag, size = 0x4, scoped, tag = 'scoped memory for tpu_custom_call.1']
    #allocation6 [shape = 'u8[131072]{0}', space=vmem, size = 0x20000, scoped, tag = 'input window, operand 1, single buffered']
    #allocation7 [shape = 's32[1]{0}', space=sflag, size = 0x4, scoped, tag = 'scoped memory for tpu_custom_call.1']
    #allocation8 [shape = 'u8[65536]{0}', space=vmem, size = 0x10000, scoped, tag = 'input window, operand 2, single buffered']
    #allocation9 [shape = 'u8[65536]{0}', space=vmem, size = 0x10000, scoped, tag = 'output window, operand 0, single buffered']
    %8 = vsyncpa [#allocation4], 0
    %9 = vsyncpa [#allocation7], 0
    %10 = vsyncpa [#allocation5], 0
    // Predicated region
    $region2: #{tpu_custom_call.1} parent=1 // pred_check
      _
    $region3: #{tpu_custom_call.1} parent=1 // pred_check_branch
      %12 = sbr.rel (0) target = $region5
    $region4: #{tpu_custom_call.1} parent=1 // pred_region
      %14 = vsyncadd [#allocation4], 0
      %s15 = sshll.u32 %s0, 4
      %s16 = int_to_ptr.hbm [resolvable:$true] %s15
      %s17 = sshll.u32 [#allocation3], 4
      %s18 = int_to_ptr.vmem [resolvable:$true] %s17
      %23 = dma.hbm_to_vmem [thread:$0]  %s16, 1024, %s18, [#allocation4], 64, 64, 4
    $region5: #{tpu_custom_call.1} parent=1 // pred_fallthru
      _
    // Predicated region
    $region6: #{tpu_custom_call.1} parent=1 // pred_check
      _
    $region7: #{tpu_custom_call.1} parent=1 // pred_check_branch
      %25 = sbr.rel (0) target = $region9
    $region8: #{tpu_custom_call.1} parent=1 // pred_region
      %27 = vsyncadd [#allocation7], 0
      %s28 = sshll.u32 %s1, 4
      %s29 = int_to_ptr.hbm [resolvable:$true] %s28
      %s30 = sshll.u32 [#allocation6], 4
      %s31 = int_to_ptr.vmem [resolvable:$true] %s30
      %36 = dma.hbm_to_vmem [thread:$0]  %s29, 4096, %s31, [#allocation7], 256, 256, 16
    $region9: #{tpu_custom_call.1} parent=1 // pred_fallthru
      _
    // Predicated region
    $region10: #{tpu_custom_call.1} parent=1 // pred_check
      _
    $region11: #{tpu_custom_call.1} parent=1 // pred_check_branch
      %38 = sbr.rel (0) target = $region13
    $region12: #{tpu_custom_call.1} parent=1 // pred_region
      %40 = vsyncadd [#allocation7], 0
      %s41 = sshll.u32 %s2, 4
      %s42 = int_to_ptr.hbm [resolvable:$true] %s41
      %s43 = sshll.u32 [#allocation8], 4
      %s44 = int_to_ptr.vmem [resolvable:$true] %s43
      %49 = dma.hbm_to_vmem [thread:$0]  %s42, 2048, %s44, [#allocation7], 64, 64, 4
    $region13: #{tpu_custom_call.1} parent=1 // pred_fallthru
      _
    // Predicated region
    $region14: #{tpu_custom_call.1} parent=1 // pred_check
      _
    $region15: #{tpu_custom_call.1} parent=1 // pred_check_branch
      %51 = sbr.rel (0) target = $region17
    $region16: #{tpu_custom_call.1} parent=1 // pred_region
      %53 = dma.done [#allocation4], 1024
    $region17: #{tpu_custom_call.1} parent=1 // pred_fallthru
      _
    // Predicated region
    $region18: #{tpu_custom_call.1} parent=1 // pred_check
      _
    $region19: #{tpu_custom_call.1} parent=1 // pred_check_branch
      %55 = sbr.rel (0) target = $region21
    $region20: #{tpu_custom_call.1} parent=1 // pred_region
      %57 = dma.done [#allocation7], 4096
    $region21: #{tpu_custom_call.1} parent=1 // pred_fallthru
      _
    // Predicated region
    $region22: #{tpu_custom_call.1} parent=1 // pred_check
      _
    $region23: #{tpu_custom_call.1} parent=1 // pred_check_branch
      %59 = sbr.rel (0) target = $region25
    $region24: #{tpu_custom_call.1} parent=1 // pred_region
      %61 = dma.done [#allocation7], 2048
    $region25: #{tpu_custom_call.1} parent=1 // pred_fallthru
      _
    %p62 = scmp.eq.s32.totalorder 0, 0
    // Predicated region
    $region26: #{tpu_custom_call.1} parent=1 // pred_check
      %p63 = pneg %p62
    $region27: #{tpu_custom_call.1} parent=1 // pred_check_branch
      %65 = sbr.rel (%p63) target = $region29
    $region28: #{tpu_custom_call.1} parent=1 // pred_region
      %66 = vst [vmem:[#allocation2] sm:$0xff] 0.0
      %67 = vst [vmem:[#allocation2 + $0x8] sm:$0xff] 0.0
      %68 = vst [vmem:[#allocation2 + $0x10] sm:$0xff] 0.0
      %69 = vst [vmem:[#allocation2 + $0x18] sm:$0xff] 0.0
      %70 = vst [vmem:[#allocation2 + $0x20] sm:$0xff] 0.0
      %71 = vst [vmem:[#allocation2 + $0x28] sm:$0xff] 0.0
      %72 = vst [vmem:[#allocation2 + $0x30] sm:$0xff] 0.0
      %73 = vst [vmem:[#allocation2 + $0x38] sm:$0xff] 0.0
      %74 = vst [vmem:[#allocation2 + $0x40] sm:$0xff] 0.0
      %75 = vst [vmem:[#allocation2 + $0x48] sm:$0xff] 0.0
      %76 = vst [vmem:[#allocation2 + $0x50] sm:$0xff] 0.0
      %77 = vst [vmem:[#allocation2 + $0x58] sm:$0xff] 0.0
      %78 = vst [vmem:[#allocation2 + $0x60] sm:$0xff] 0.0
      %79 = vst [vmem:[#allocation2 + $0x68] sm:$0xff] 0.0
      %80 = vst [vmem:[#allocation2 + $0x70] sm:$0xff] 0.0
      %81 = vst [vmem:[#allocation2 + $0x78] sm:$0xff] 0.0
    $region29: #{tpu_custom_call.1} parent=1 // pred_fallthru
      _
    %v82 = vld [vmem:[#allocation3] sm:$0xf]
    %v83 = vld [vmem:[#allocation3 + $0x4] sm:$0xf]
    %v84 = vld [vmem:[#allocation3 + $0x8] sm:$0xf]
    %v85 = vld [vmem:[#allocation3 + $0xc] sm:$0xf]
    %v86 = vld [vmem:[#allocation3 + $0x10] sm:$0xf]
    %v87 = vld [vmem:[#allocation3 + $0x14] sm:$0xf]
    %v88 = vld [vmem:[#allocation3 + $0x18] sm:$0xf]
    %v89 = vld [vmem:[#allocation3 + $0x1c] sm:$0xf]
    %v90 = vld [vmem:[#allocation3 + $0x20] sm:$0xf]
    %v91 = vld [vmem:[#allocation3 + $0x24] sm:$0xf]
    %v92 = vld [vmem:[#allocation3 + $0x28] sm:$0xf]
    %v93 = vld [vmem:[#allocation3 + $0x2c] sm:$0xf]
    %v94 = vld [vmem:[#allocation3 + $0x30] sm:$0xf]
    %v95 = vld [vmem:[#allocation3 + $0x34] sm:$0xf]
    %v96 = vld [vmem:[#allocation3 + $0x38] sm:$0xf]
    %v97 = vld [vmem:[#allocation3 + $0x3c] sm:$0xf]
    %v98 = vld [vmem:[#allocation6] sm:$0xff]
    %v99 = vld [vmem:[#allocation6 + $0x8] sm:$0xff]
    %v100 = vld [vmem:[#allocation6 + $0x10] sm:$0xff]
    %v101 = vld [vmem:[#allocation6 + $0x18] sm:$0xff]
    %v102 = vld [vmem:[#allocation6 + $0x20] sm:$0xff]
    %v103 = vld [vmem:[#allocation6 + $0x28] sm:$0xff]
    %v104 = vld [vmem:[#allocation6 + $0x30] sm:$0xff]
    %v105 = vld [vmem:[#allocation6 + $0x38] sm:$0xff]
    %v106 = vld [vmem:[#allocation6 + $0x40] sm:$0xff]
    %v107 = vld [vmem:[#allocation6 + $0x48] sm:$0xff]
    %v108 = vld [vmem:[#allocation6 + $0x50] sm:$0xff]
    %v109 = vld [vmem:[#allocation6 + $0x58] sm:$0xff]
    %v110 = vld [vmem:[#allocation6 + $0x60] sm:$0xff]
    %v111 = vld [vmem:[#allocation6 + $0x68] sm:$0xff]
    %v112 = vld [vmem:[#allocation6 + $0x70] sm:$0xff]
    %v113 = vld [vmem:[#allocation6 + $0x78] sm:$0xff]
    %v114 = vld [vmem:[#allocation6 + $0x80] sm:$0xff]
    %v115 = vld [vmem:[#allocation6 + $0x88] sm:$0xff]
    %v116 = vld [vmem:[#allocation6 + $0x90] sm:$0xff]
    %v117 = vld [vmem:[#allocation6 + $0x98] sm:$0xff]
    %v118 = vld [vmem:[#allocation6 + $0xa0] sm:$0xff]
    %v119 = vld [vmem:[#allocation6 + $0xa8] sm:$0xff]
    %v120 = vld [vmem:[#allocation6 + $0xb0] sm:$0xff]
    %v121 = vld [vmem:[#allocation6 + $0xb8] sm:$0xff]
    %v122 = vld [vmem:[#allocation6 + $0xc0] sm:$0xff]
    %v123 = vld [vmem:[#allocation6 + $0xc8] sm:$0xff]
    %v124 = vld [vmem:[#allocation6 + $0xd0] sm:$0xff]
    %v125 = vld [vmem:[#allocation6 + $0xd8] sm:$0xff]
    %v126 = vld [vmem:[#allocation6 + $0xe0] sm:$0xff]
    %v127 = vld [vmem:[#allocation6 + $0xe8] sm:$0xff]
    %v128 = vld [vmem:[#allocation6 + $0xf0] sm:$0xff]
    %v129 = vld [vmem:[#allocation6 + $0xf8] sm:$0xff]
    %v146 = vunpack.c.l.b16 %v82
    %v147 = vunpack.c.l.b16 %v83
    %v148 = vunpack.c.l.b16 %v84
    %v149 = vunpack.c.l.b16 %v85
    %v150 = vunpack.c.l.b16 %v86
    %v151 = vunpack.c.l.b16 %v87
    %v152 = vunpack.c.l.b16 %v88
    %v153 = vunpack.c.l.b16 %v89
    %v154 = vunpack.c.l.b16 %v90
    %v155 = vunpack.c.l.b16 %v91
    %v156 = vunpack.c.l.b16 %v92
    %v157 = vunpack.c.l.b16 %v93
    %v158 = vunpack.c.l.b16 %v94
    %v159 = vunpack.c.l.b16 %v95
    %v160 = vunpack.c.l.b16 %v96
    %v161 = vunpack.c.l.b16 %v97
    %v162 = vpack.c.b16 %v147, %v146
    %v163 = vpack.c.b16 %v149, %v148
    %v164 = vpack.c.b16 %v151, %v150
    %v165 = vpack.c.b16 %v153, %v152
    %v166 = vpack.c.b16 %v155, %v154
    %v167 = vpack.c.b16 %v157, %v156
    %v168 = vpack.c.b16 %v159, %v158
    %v169 = vpack.c.b16 %v161, %v160
    %v210 = vunpack.c.l.b16 %v98
    %v211 = vunpack.c.h.b16 %v98
    %v212 = vunpack.c.l.b16 %v99
    %v213 = vunpack.c.h.b16 %v99
    %v214 = vunpack.c.l.b16 %v100
    %v215 = vunpack.c.h.b16 %v100
    %v216 = vunpack.c.l.b16 %v101
    %v217 = vunpack.c.h.b16 %v101
    %v218 = vunpack.c.l.b16 %v102
    %v219 = vunpack.c.h.b16 %v102
    %v220 = vunpack.c.l.b16 %v103
    %v221 = vunpack.c.h.b16 %v103
    %v222 = vunpack.c.l.b16 %v104
    %v223 = vunpack.c.h.b16 %v104
    %v224 = vunpack.c.l.b16 %v105
    %v225 = vunpack.c.h.b16 %v105
    %v226 = vunpack.c.l.b16 %v106
    %v227 = vunpack.c.h.b16 %v106
    %v228 = vunpack.c.l.b16 %v107
    %v229 = vunpack.c.h.b16 %v107
    %v230 = vunpack.c.l.b16 %v108
    %v231 = vunpack.c.h.b16 %v108
    %v232 = vunpack.c.l.b16 %v109
    %v233 = vunpack.c.h.b16 %v109
    %v234 = vunpack.c.l.b16 %v110
    %v235 = vunpack.c.h.b16 %v110
    %v236 = vunpack.c.l.b16 %v111
    %v237 = vunpack.c.h.b16 %v111
    %v238 = vunpack.c.l.b16 %v112
    %v239 = vunpack.c.h.b16 %v112
    %v240 = vunpack.c.l.b16 %v113
    %v241 = vunpack.c.h.b16 %v113
    %v242 = vunpack.c.l.b16 %v114
    %v243 = vunpack.c.h.b16 %v114
    %v244 = vunpack.c.l.b16 %v115
    %v245 = vunpack.c.h.b16 %v115
    %v246 = vunpack.c.l.b16 %v116
    %v247 = vunpack.c.h.b16 %v116
    %v248 = vunpack.c.l.b16 %v117
    %v249 = vunpack.c.h.b16 %v117
    %v250 = vunpack.c.l.b16 %v118
    %v251 = vunpack.c.h.b16 %v118
    %v252 = vunpack.c.l.b16 %v119
    %v253 = vunpack.c.h.b16 %v119
    %v254 = vunpack.c.l.b16 %v120
    %v255 = vunpack.c.h.b16 %v120
    %v256 = vunpack.c.l.b16 %v121
    %v257 = vunpack.c.h.b16 %v121
    %v258 = vunpack.c.l.b16 %v122
    %v259 = vunpack.c.h.b16 %v122
    %v260 = vunpack.c.l.b16 %v123
    %v261 = vunpack.c.h.b16 %v123
    %v262 = vunpack.c.l.b16 %v124
    %v263 = vunpack.c.h.b16 %v124
    %v264 = vunpack.c.l.b16 %v125
    %v265 = vunpack.c.h.b16 %v125
    %v266 = vunpack.c.l.b16 %v126
    %v267 = vunpack.c.h.b16 %v126
    %v268 = vunpack.c.l.b16 %v127
    %v269 = vunpack.c.h.b16 %v127
    %v270 = vunpack.c.l.b16 %v128
    %v271 = vunpack.c.h.b16 %v128
    %v272 = vunpack.c.l.b16 %v129
    %v273 = vunpack.c.h.b16 %v129
    %v274 = vpack.c.b16 %v214, %v210
    %v275 = vpack.c.b16 %v215, %v211
    %v276 = vpack.c.b16 %v216, %v212
    %v277 = vpack.c.b16 %v217, %v213
    %v278 = vpack.c.b16 %v222, %v218
    %v279 = vpack.c.b16 %v223, %v219
    %v280 = vpack.c.b16 %v224, %v220
    %v281 = vpack.c.b16 %v225, %v221
    %v282 = vpack.c.b16 %v230, %v226
    %v283 = vpack.c.b16 %v231, %v227
    %v284 = vpack.c.b16 %v232, %v228
    %v285 = vpack.c.b16 %v233, %v229
    %v286 = vpack.c.b16 %v238, %v234
    %v287 = vpack.c.b16 %v239, %v235
    %v288 = vpack.c.b16 %v240, %v236
    %v289 = vpack.c.b16 %v241, %v237
    %v290 = vpack.c.b16 %v246, %v242
    %v291 = vpack.c.b16 %v247, %v243
    %v292 = vpack.c.b16 %v248, %v244
    %v293 = vpack.c.b16 %v249, %v245
    %v294 = vpack.c.b16 %v254, %v250
    %v295 = vpack.c.b16 %v255, %v251
    %v296 = vpack.c.b16 %v256, %v252
    %v297 = vpack.c.b16 %v257, %v253
    %v298 = vpack.c.b16 %v262, %v258
    %v299 = vpack.c.b16 %v263, %v259
    %v300 = vpack.c.b16 %v264, %v260
    %v301 = vpack.c.b16 %v265, %v261
    %v302 = vpack.c.b16 %v270, %v266
    %v303 = vpack.c.b16 %v271, %v267
    %v304 = vpack.c.b16 %v272, %v268
    %v305 = vpack.c.b16 %v273, %v269
    %338 = vmatpush.bf16.msra.mxu0 %v302
    %339 = vmatpush.bf16.msra.mxu0 %v298
    %340 = vmatpush.bf16.msra.mxu0 %v294
    %341 = vmatpush.bf16.msra.mxu0 %v290
    %342 = vmatpush.bf16.msra.mxu0 %v286
    %343 = vmatpush.bf16.msra.mxu0 %v282
    %344 = vmatpush.bf16.msra.mxu0 %v278
    %345 = vmatpush.bf16.msra.mxu0 %v274
    %346 = vmatmul.bf16.gmra.mxu0 %v162
    %v347 = vpop.f32.mrf.mxu0
    %v348 = vadd.f32 0.0, %v347
    %v349 = vpop.f32.mrf.mxu0
    %v350 = vadd.f32 0.0, %v349
    %351 = vmatmul.bf16.gmra.mxu0 %v163
    %v352 = vpop.f32.mrf.mxu0
    %v353 = vadd.f32 0.0, %v352
    %v354 = vpop.f32.mrf.mxu0
    %v355 = vadd.f32 0.0, %v354
    %356 = vmatmul.bf16.gmra.mxu0 %v164
    %v357 = vpop.f32.mrf.mxu0
    %v358 = vadd.f32 0.0, %v357
    %v359 = vpop.f32.mrf.mxu0
    %v360 = vadd.f32 0.0, %v359
    %361 = vmatmul.bf16.gmra.mxu0 %v165
    %v362 = vpop.f32.mrf.mxu0
    %v363 = vadd.f32 0.0, %v362
    %v364 = vpop.f32.mrf.mxu0
    %v365 = vadd.f32 0.0, %v364
    %366 = vmatmul.bf16.gmra.mxu0 %v166
    %v367 = vpop.f32.mrf.mxu0
    %v368 = vadd.f32 0.0, %v367
    %v369 = vpop.f32.mrf.mxu0
    %v370 = vadd.f32 0.0, %v369
    %371 = vmatmul.bf16.gmra.mxu0 %v167
    %v372 = vpop.f32.mrf.mxu0
    %v373 = vadd.f32 0.0, %v372
    %v374 = vpop.f32.mrf.mxu0
    %v375 = vadd.f32 0.0, %v374
    %376 = vmatmul.bf16.gmra.mxu0 %v168
    %v377 = vpop.f32.mrf.mxu0
    %v378 = vadd.f32 0.0, %v377
    %v379 = vpop.f32.mrf.mxu0
    %v380 = vadd.f32 0.0, %v379
    %381 = vmatmul.bf16.gmra.mxu0 %v169
    %v382 = vpop.f32.mrf.mxu0
    %v383 = vadd.f32 0.0, %v382
    %v384 = vpop.f32.mrf.mxu0
    %v385 = vadd.f32 0.0, %v384
    %386 = vdwg.mxu0
    %387 = vmatpush.bf16.msra.mxu0 %v303
    %388 = vmatpush.bf16.msra.mxu0 %v299
    %389 = vmatpush.bf16.msra.mxu0 %v295
    %390 = vmatpush.bf16.msra.mxu0 %v291
    %391 = vmatpush.bf16.msra.mxu0 %v287
    %392 = vmatpush.bf16.msra.mxu0 %v283
    %393 = vmatpush.bf16.msra.mxu0 %v279
    %394 = vmatpush.bf16.msra.mxu0 %v275
    %395 = vmatmul.bf16.gmra.mxu0 %v162
    %v396 = vpop.f32.mrf.mxu0
    %v397 = vadd.f32 0.0, %v396
    %v398 = vpop.f32.mrf.mxu0
    %v399 = vadd.f32 0.0, %v398
    %400 = vmatmul.bf16.gmra.mxu0 %v163
    %v401 = vpop.f32.mrf.mxu0
    %v402 = vadd.f32 0.0, %v401
    %v403 = vpop.f32.mrf.mxu0
    %v404 = vadd.f32 0.0, %v403
    %405 = vmatmul.bf16.gmra.mxu0 %v164
    %v406 = vpop.f32.mrf.mxu0
    %v407 = vadd.f32 0.0, %v406
    %v408 = vpop.f32.mrf.mxu0
    %v409 = vadd.f32 0.0, %v408
    %410 = vmatmul.bf16.gmra.mxu0 %v165
    %v411 = vpop.f32.mrf.mxu0
    %v412 = vadd.f32 0.0, %v411
    %v413 = vpop.f32.mrf.mxu0
    %v414 = vadd.f32 0.0, %v413
    %415 = vmatmul.bf16.gmra.mxu0 %v166
    %v416 = vpop.f32.mrf.mxu0
    %v417 = vadd.f32 0.0, %v416
    %v418 = vpop.f32.mrf.mxu0
    %v419 = vadd.f32 0.0, %v418
    %420 = vmatmul.bf16.gmra.mxu0 %v167
    %v421 = vpop.f32.mrf.mxu0
    %v422 = vadd.f32 0.0, %v421
    %v423 = vpop.f32.mrf.mxu0
    %v424 = vadd.f32 0.0, %v423
    %425 = vmatmul.bf16.gmra.mxu0 %v168
    %v426 = vpop.f32.mrf.mxu0
    %v427 = vadd.f32 0.0, %v426
    %v428 = vpop.f32.mrf.mxu0
    %v429 = vadd.f32 0.0, %v428
    %430 = vmatmul.bf16.gmra.mxu0 %v169
    %v431 = vpop.f32.mrf.mxu0
    %v432 = vadd.f32 0.0, %v431
    %v433 = vpop.f32.mrf.mxu0
    %v434 = vadd.f32 0.0, %v433
    %435 = vdwg.mxu0
    %436 = vmatpush.bf16.msra.mxu0 %v304
    %437 = vmatpush.bf16.msra.mxu0 %v300
    %438 = vmatpush.bf16.msra.mxu0 %v296
    %439 = vmatpush.bf16.msra.mxu0 %v292
    %440 = vmatpush.bf16.msra.mxu0 %v288
    %441 = vmatpush.bf16.msra.mxu0 %v284
    %442 = vmatpush.bf16.msra.mxu0 %v280
    %443 = vmatpush.bf16.msra.mxu0 %v276
    %444 = vmatmul.bf16.gmra.mxu0 %v162
    %v445 = vpop.f32.mrf.mxu0
    %v446 = vadd.f32 0.0, %v445
    %v447 = vpop.f32.mrf.mxu0
    %v448 = vadd.f32 0.0, %v447
    %449 = vmatmul.bf16.gmra.mxu0 %v163
    %v450 = vpop.f32.mrf.mxu0
    %v451 = vadd.f32 0.0, %v450
    %v452 = vpop.f32.mrf.mxu0
    %v453 = vadd.f32 0.0, %v452
    %454 = vmatmul.bf16.gmra.mxu0 %v164
    %v455 = vpop.f32.mrf.mxu0
    %v456 = vadd.f32 0.0, %v455
    %v457 = vpop.f32.mrf.mxu0
    %v458 = vadd.f32 0.0, %v457
    %459 = vmatmul.bf16.gmra.mxu0 %v165
    %v460 = vpop.f32.mrf.mxu0
    %v461 = vadd.f32 0.0, %v460
    %v462 = vpop.f32.mrf.mxu0
    %v463 = vadd.f32 0.0, %v462
    %464 = vmatmul.bf16.gmra.mxu0 %v166
    %v465 = vpop.f32.mrf.mxu0
    %v466 = vadd.f32 0.0, %v465
    %v467 = vpop.f32.mrf.mxu0
    %v468 = vadd.f32 0.0, %v467
    %469 = vmatmul.bf16.gmra.mxu0 %v167
    %v470 = vpop.f32.mrf.mxu0
    %v471 = vadd.f32 0.0, %v470
    %v472 = vpop.f32.mrf.mxu0
    %v473 = vadd.f32 0.0, %v472
    %474 = vmatmul.bf16.gmra.mxu0 %v168
    %v475 = vpop.f32.mrf.mxu0
    %v476 = vadd.f32 0.0, %v475
    %v477 = vpop.f32.mrf.mxu0
    %v478 = vadd.f32 0.0, %v477
    %479 = vmatmul.bf16.gmra.mxu0 %v169
    %v480 = vpop.f32.mrf.mxu0
    %v481 = vadd.f32 0.0, %v480
    %v482 = vpop.f32.mrf.mxu0
    %v483 = vadd.f32 0.0, %v482
    %484 = vdwg.mxu0
    %485 = vmatpush.bf16.msra.mxu0 %v305
    %486 = vmatpush.bf16.msra.mxu0 %v301
    %487 = vmatpush.bf16.msra.mxu0 %v297
    %488 = vmatpush.bf16.msra.mxu0 %v293
    %489 = vmatpush.bf16.msra.mxu0 %v289
    %490 = vmatpush.bf16.msra.mxu0 %v285
    %491 = vmatpush.bf16.msra.mxu0 %v281
    %492 = vmatpush.bf16.msra.mxu0 %v277
    %493 = vmatmul.bf16.gmra.mxu0 %v162
    %v494 = vpop.f32.mrf.mxu0
    %v495 = vadd.f32 0.0, %v494
    %v496 = vpop.f32.mrf.mxu0
    %v497 = vadd.f32 0.0, %v496
    %498 = vmatmul.bf16.gmra.mxu0 %v163
    %v499 = vpop.f32.mrf.mxu0
    %v500 = vadd.f32 0.0, %v499
    %v501 = vpop.f32.mrf.mxu0
    %v502 = vadd.f32 0.0, %v501
    %503 = vmatmul.bf16.gmra.mxu0 %v164
    %v504 = vpop.f32.mrf.mxu0
    %v505 = vadd.f32 0.0, %v504
    %v506 = vpop.f32.mrf.mxu0
    %v507 = vadd.f32 0.0, %v506
    %508 = vmatmul.bf16.gmra.mxu0 %v165
    %v509 = vpop.f32.mrf.mxu0
    %v510 = vadd.f32 0.0, %v509
    %v511 = vpop.f32.mrf.mxu0
    %v512 = vadd.f32 0.0, %v511
    %513 = vmatmul.bf16.gmra.mxu0 %v166
    %v514 = vpop.f32.mrf.mxu0
    %v515 = vadd.f32 0.0, %v514
    %v516 = vpop.f32.mrf.mxu0
    %v517 = vadd.f32 0.0, %v516
    %518 = vmatmul.bf16.gmra.mxu0 %v167
    %v519 = vpop.f32.mrf.mxu0
    %v520 = vadd.f32 0.0, %v519
    %v521 = vpop.f32.mrf.mxu0
    %v522 = vadd.f32 0.0, %v521
    %523 = vmatmul.bf16.gmra.mxu0 %v168
    %v524 = vpop.f32.mrf.mxu0
    %v525 = vadd.f32 0.0, %v524
    %v526 = vpop.f32.mrf.mxu0
    %v527 = vadd.f32 0.0, %v526
    %528 = vmatmul.bf16.gmra.mxu0 %v169
    %v529 = vpop.f32.mrf.mxu0
    %v530 = vadd.f32 0.0, %v529
    %v531 = vpop.f32.mrf.mxu0
    %v532 = vadd.f32 0.0, %v531
    %533 = vdwg.mxu0
    %v534 = vxor.u32 %v348, 2147483648
    %v535 = vxor.u32 %v397, 2147483648
    %v536 = vxor.u32 %v350, 2147483648
    %v537 = vxor.u32 %v399, 2147483648
    %v538 = vxor.u32 %v353, 2147483648
    %v539 = vxor.u32 %v402, 2147483648
    %v540 = vxor.u32 %v355, 2147483648
    %v541 = vxor.u32 %v404, 2147483648
    %v542 = vxor.u32 %v358, 2147483648
    %v543 = vxor.u32 %v407, 2147483648
    %v544 = vxor.u32 %v360, 2147483648
    %v545 = vxor.u32 %v409, 2147483648
    %v546 = vxor.u32 %v363, 2147483648
    %v547 = vxor.u32 %v412, 2147483648
    %v548 = vxor.u32 %v365, 2147483648
    %v549 = vxor.u32 %v414, 2147483648
    %v550 = vxor.u32 %v368, 2147483648
    %v551 = vxor.u32 %v417, 2147483648
    %v552 = vxor.u32 %v370, 2147483648
    %v553 = vxor.u32 %v419, 2147483648
    %v554 = vxor.u32 %v373, 2147483648
    %v555 = vxor.u32 %v422, 2147483648
    %v556 = vxor.u32 %v375, 2147483648
    %v557 = vxor.u32 %v424, 2147483648
    %v558 = vxor.u32 %v378, 2147483648
    %v559 = vxor.u32 %v427, 2147483648
    %v560 = vxor.u32 %v380, 2147483648
    %v561 = vxor.u32 %v429, 2147483648
    %v562 = vxor.u32 %v383, 2147483648
    %v563 = vxor.u32 %v432, 2147483648
    %v564 = vxor.u32 %v385, 2147483648
    %v565 = vxor.u32 %v434, 2147483648
    %v566 = vmul.f32 %v534, 1.442695
    %v567 = vpow.pop %v566
    %v568 = vmul.f32 %v535, 1.442695
    %v569 = vpow.pop %v568
    %v570 = vmul.f32 %v536, 1.442695
    %v571 = vpow.pop %v570
    %v572 = vmul.f32 %v537, 1.442695
    %v573 = vpow.pop %v572
    %v574 = vmul.f32 %v538, 1.442695
    %v575 = vpow.pop %v574
    %v576 = vmul.f32 %v539, 1.442695
    %v577 = vpow.pop %v576
    %v578 = vmul.f32 %v540, 1.442695
    %v579 = vpow.pop %v578
    %v580 = vmul.f32 %v541, 1.442695
    %v581 = vpow.pop %v580
    %v582 = vmul.f32 %v542, 1.442695
    %v583 = vpow.pop %v582
    %v584 = vmul.f32 %v543, 1.442695
    %v585 = vpow.pop %v584
    %v586 = vmul.f32 %v544, 1.442695
    %v587 = vpow.pop %v586
    %v588 = vmul.f32 %v545, 1.442695
    %v589 = vpow.pop %v588
    %v590 = vmul.f32 %v546, 1.442695
    %v591 = vpow.pop %v590
    %v592 = vmul.f32 %v547, 1.442695
    %v593 = vpow.pop %v592
    %v594 = vmul.f32 %v548, 1.442695
    %v595 = vpow.pop %v594
    %v596 = vmul.f32 %v549, 1.442695
    %v597 = vpow.pop %v596
    %v598 = vmul.f32 %v550, 1.442695
    %v599 = vpow.pop %v598
    %v600 = vmul.f32 %v551, 1.442695
    %v601 = vpow.pop %v600
    %v602 = vmul.f32 %v552, 1.442695
    %v603 = vpow.pop %v602
    %v604 = vmul.f32 %v553, 1.442695
    %v605 = vpow.pop %v604
    %v606 = vmul.f32 %v554, 1.442695
    %v607 = vpow.pop %v606
    %v608 = vmul.f32 %v555, 1.442695
    %v609 = vpow.pop %v608
    %v610 = vmul.f32 %v556, 1.442695
    %v611 = vpow.pop %v610
    %v612 = vmul.f32 %v557, 1.442695
    %v613 = vpow.pop %v612
    %v614 = vmul.f32 %v558, 1.442695
    %v615 = vpow.pop %v614
    %v616 = vmul.f32 %v559, 1.442695
    %v617 = vpow.pop %v616
    %v618 = vmul.f32 %v560, 1.442695
    %v619 = vpow.pop %v618
    %v620 = vmul.f32 %v561, 1.442695
    %v621 = vpow.pop %v620
    %v622 = vmul.f32 %v562, 1.442695
    %v623 = vpow.pop %v622
    %v624 = vmul.f32 %v563, 1.442695
    %v625 = vpow.pop %v624
    %v626 = vmul.f32 %v564, 1.442695
    %v627 = vpow.pop %v626
    %v628 = vmul.f32 %v565, 1.442695
    %v629 = vpow.pop %v628
    %v630 = vadd.f32 %v567, 1.0
    %v631 = vadd.f32 %v569, 1.0
    %v632 = vadd.f32 %v571, 1.0
    %v633 = vadd.f32 %v573, 1.0
    %v634 = vadd.f32 %v575, 1.0
    %v635 = vadd.f32 %v577, 1.0
    %v636 = vadd.f32 %v579, 1.0
    %v637 = vadd.f32 %v581, 1.0
    %v638 = vadd.f32 %v583, 1.0
    %v639 = vadd.f32 %v585, 1.0
    %v640 = vadd.f32 %v587, 1.0
    %v641 = vadd.f32 %v589, 1.0
    %v642 = vadd.f32 %v591, 1.0
    %v643 = vadd.f32 %v593, 1.0
    %v644 = vadd.f32 %v595, 1.0
    %v645 = vadd.f32 %v597, 1.0
    %v646 = vadd.f32 %v599, 1.0
    %v647 = vadd.f32 %v601, 1.0
    %v648 = vadd.f32 %v603, 1.0
    %v649 = vadd.f32 %v605, 1.0
    %v650 = vadd.f32 %v607, 1.0
    %v651 = vadd.f32 %v609, 1.0
    %v652 = vadd.f32 %v611, 1.0
    %v653 = vadd.f32 %v613, 1.0
    %v654 = vadd.f32 %v615, 1.0
    %v655 = vadd.f32 %v617, 1.0
    %v656 = vadd.f32 %v619, 1.0
    %v657 = vadd.f32 %v621, 1.0
    %v658 = vadd.f32 %v623, 1.0
    %v659 = vadd.f32 %v625, 1.0
    %v660 = vadd.f32 %v627, 1.0
    %v661 = vadd.f32 %v629, 1.0
    %v662 = vrcp.pop %v630
    %v663 = vmul.f32 %v630, %v662
    %v664 = vsub.f32 1.0, %v663
    %v665 = vmul.f32 %v662, %v664
    %v666 = vadd.f32 %v662, %v665
    %vm667 = vweird.f32 %v630
    %vm668 = vweird.f32 %v662
    %vm669 = vmor %vm667, %vm668
    %v670 = vsel %vm669, %v662, %v666
    %v671 = vand.u32 2147483647, %v630
    %vm672 = vcmp.eq.f32.partialorder %v671, 8.507059e+37
    %v673 = vand.u32 %v630, 2147483648
    %v674 = vor.u32 1.1754944e-38, %v673
    %v675 = vsel %vm672, %v674, %v670
    %v676 = vmul.f32 1.0, %v675
    %v677 = vrcp.pop %v631
    %v678 = vmul.f32 %v631, %v677
    %v679 = vsub.f32 1.0, %v678
    %v680 = vmul.f32 %v677, %v679
    %v681 = vadd.f32 %v677, %v680
    %vm682 = vweird.f32 %v631
    %vm683 = vweird.f32 %v677
    %vm684 = vmor %vm682, %vm683
    %v685 = vsel %vm684, %v677, %v681
    %v686 = vand.u32 2147483647, %v631
    %vm687 = vcmp.eq.f32.partialorder %v686, 8.507059e+37
    %v688 = vand.u32 %v631, 2147483648
    %v689 = vor.u32 1.1754944e-38, %v688
    %v690 = vsel %vm687, %v689, %v685
    %v691 = vmul.f32 1.0, %v690
    %v692 = vrcp.pop %v632
    %v693 = vmul.f32 %v632, %v692
    %v694 = vsub.f32 1.0, %v693
    %v695 = vmul.f32 %v692, %v694
    %v696 = vadd.f32 %v692, %v695
    %vm697 = vweird.f32 %v632
    %vm698 = vweird.f32 %v692
    %vm699 = vmor %vm697, %vm698
    %v700 = vsel %vm699, %v692, %v696
    %v701 = vand.u32 2147483647, %v632
    %vm702 = vcmp.eq.f32.partialorder %v701, 8.507059e+37
    %v703 = vand.u32 %v632, 2147483648
    %v704 = vor.u32 1.1754944e-38, %v703
    %v705 = vsel %vm702, %v704, %v700
    %v706 = vmul.f32 1.0, %v705
    %v707 = vrcp.pop %v633
    %v708 = vmul.f32 %v633, %v707
    %v709 = vsub.f32 1.0, %v708
    %v710 = vmul.f32 %v707, %v709
    %v711 = vadd.f32 %v707, %v710
    %vm712 = vweird.f32 %v633
    %vm713 = vweird.f32 %v707
    %vm714 = vmor %vm712, %vm713
    %v715 = vsel %vm714, %v707, %v711
    %v716 = vand.u32 2147483647, %v633
    %vm717 = vcmp.eq.f32.partialorder %v716, 8.507059e+37
    %v718 = vand.u32 %v633, 2147483648
    %v719 = vor.u32 1.1754944e-38, %v718
    %v720 = vsel %vm717, %v719, %v715
    %v721 = vmul.f32 1.0, %v720
    %v722 = vrcp.pop %v634
    %v723 = vmul.f32 %v634, %v722
    %v724 = vsub.f32 1.0, %v723
    %v725 = vmul.f32 %v722, %v724
    %v726 = vadd.f32 %v722, %v725
    %vm727 = vweird.f32 %v634
    %vm728 = vweird.f32 %v722
    %vm729 = vmor %vm727, %vm728
    %v730 = vsel %vm729, %v722, %v726
    %v731 = vand.u32 2147483647, %v634
    %vm732 = vcmp.eq.f32.partialorder %v731, 8.507059e+37
    %v733 = vand.u32 %v634, 2147483648
    %v734 = vor.u32 1.1754944e-38, %v733
    %v735 = vsel %vm732, %v734, %v730
    %v736 = vmul.f32 1.0, %v735
    %v737 = vrcp.pop %v635
    %v738 = vmul.f32 %v635, %v737
    %v739 = vsub.f32 1.0, %v738
    %v740 = vmul.f32 %v737, %v739
    %v741 = vadd.f32 %v737, %v740
    %vm742 = vweird.f32 %v635
    %vm743 = vweird.f32 %v737
    %vm744 = vmor %vm742, %vm743
    %v745 = vsel %vm744, %v737, %v741
    %v746 = vand.u32 2147483647, %v635
    %vm747 = vcmp.eq.f32.partialorder %v746, 8.507059e+37
    %v748 = vand.u32 %v635, 2147483648
    %v749 = vor.u32 1.1754944e-38, %v748
    %v750 = vsel %vm747, %v749, %v745
    %v751 = vmul.f32 1.0, %v750
    %v752 = vrcp.pop %v636
    %v753 = vmul.f32 %v636, %v752
    %v754 = vsub.f32 1.0, %v753
    %v755 = vmul.f32 %v752, %v754
    %v756 = vadd.f32 %v752, %v755
    %vm757 = vweird.f32 %v636
    %vm758 = vweird.f32 %v752
    %vm759 = vmor %vm757, %vm758
    %v760 = vsel %vm759, %v752, %v756
    %v761 = vand.u32 2147483647, %v636
    %vm762 = vcmp.eq.f32.partialorder %v761, 8.507059e+37
    %v763 = vand.u32 %v636, 2147483648
    %v764 = vor.u32 1.1754944e-38, %v763
    %v765 = vsel %vm762, %v764, %v760
    %v766 = vmul.f32 1.0, %v765
    %v767 = vrcp.pop %v637
    %v768 = vmul.f32 %v637, %v767
    %v769 = vsub.f32 1.0, %v768
    %v770 = vmul.f32 %v767, %v769
    %v771 = vadd.f32 %v767, %v770
    %vm772 = vweird.f32 %v637
    %vm773 = vweird.f32 %v767
    %vm774 = vmor %vm772, %vm773
    %v775 = vsel %vm774, %v767, %v771
    %v776 = vand.u32 2147483647, %v637
    %vm777 = vcmp.eq.f32.partialorder %v776, 8.507059e+37
    %v778 = vand.u32 %v637, 2147483648
    %v779 = vor.u32 1.1754944e-38, %v778
    %v780 = vsel %vm777, %v779, %v775
    %v781 = vmul.f32 1.0, %v780
    %v782 = vrcp.pop %v638
    %v783 = vmul.f32 %v638, %v782
    %v784 = vsub.f32 1.0, %v783
    %v785 = vmul.f32 %v782, %v784
    %v786 = vadd.f32 %v782, %v785
    %vm787 = vweird.f32 %v638
    %vm788 = vweird.f32 %v782
    %vm789 = vmor %vm787, %vm788
    %v790 = vsel %vm789, %v782, %v786
    %v791 = vand.u32 2147483647, %v638
    %vm792 = vcmp.eq.f32.partialorder %v791, 8.507059e+37
    %v793 = vand.u32 %v638, 2147483648
    %v794 = vor.u32 1.1754944e-38, %v793
    %v795 = vsel %vm792, %v794, %v790
    %v796 = vmul.f32 1.0, %v795
    %v797 = vrcp.pop %v639
    %v798 = vmul.f32 %v639, %v797
    %v799 = vsub.f32 1.0, %v798
    %v800 = vmul.f32 %v797, %v799
    %v801 = vadd.f32 %v797, %v800
    %vm802 = vweird.f32 %v639
    %vm803 = vweird.f32 %v797
    %vm804 = vmor %vm802, %vm803
    %v805 = vsel %vm804, %v797, %v801
    %v806 = vand.u32 2147483647, %v639
    %vm807 = vcmp.eq.f32.partialorder %v806, 8.507059e+37
    %v808 = vand.u32 %v639, 2147483648
    %v809 = vor.u32 1.1754944e-38, %v808
    %v810 = vsel %vm807, %v809, %v805
    %v811 = vmul.f32 1.0, %v810
    %v812 = vrcp.pop %v640
    %v813 = vmul.f32 %v640, %v812
    %v814 = vsub.f32 1.0, %v813
    %v815 = vmul.f32 %v812, %v814
    %v816 = vadd.f32 %v812, %v815
    %vm817 = vweird.f32 %v640
    %vm818 = vweird.f32 %v812
    %vm819 = vmor %vm817, %vm818
    %v820 = vsel %vm819, %v812, %v816
    %v821 = vand.u32 2147483647, %v640
    %vm822 = vcmp.eq.f32.partialorder %v821, 8.507059e+37
    %v823 = vand.u32 %v640, 2147483648
    %v824 = vor.u32 1.1754944e-38, %v823
    %v825 = vsel %vm822, %v824, %v820
    %v826 = vmul.f32 1.0, %v825
    %v827 = vrcp.pop %v641
    %v828 = vmul.f32 %v641, %v827
    %v829 = vsub.f32 1.0, %v828
    %v830 = vmul.f32 %v827, %v829
    %v831 = vadd.f32 %v827, %v830
    %vm832 = vweird.f32 %v641
    %vm833 = vweird.f32 %v827
    %vm834 = vmor %vm832, %vm833
    %v835 = vsel %vm834, %v827, %v831
    %v836 = vand.u32 2147483647, %v641
    %vm837 = vcmp.eq.f32.partialorder %v836, 8.507059e+37
    %v838 = vand.u32 %v641, 2147483648
    %v839 = vor.u32 1.1754944e-38, %v838
    %v840 = vsel %vm837, %v839, %v835
    %v841 = vmul.f32 1.0, %v840
    %v842 = vrcp.pop %v642
    %v843 = vmul.f32 %v642, %v842
    %v844 = vsub.f32 1.0, %v843
    %v845 = vmul.f32 %v842, %v844
    %v846 = vadd.f32 %v842, %v845
    %vm847 = vweird.f32 %v642
    %vm848 = vweird.f32 %v842
    %vm849 = vmor %vm847, %vm848
    %v850 = vsel %vm849, %v842, %v846
    %v851 = vand.u32 2147483647, %v642
    %vm852 = vcmp.eq.f32.partialorder %v851, 8.507059e+37
    %v853 = vand.u32 %v642, 2147483648
    %v854 = vor.u32 1.1754944e-38, %v853
    %v855 = vsel %vm852, %v854, %v850
    %v856 = vmul.f32 1.0, %v855
    %v857 = vrcp.pop %v643
    %v858 = vmul.f32 %v643, %v857
    %v859 = vsub.f32 1.0, %v858
    %v860 = vmul.f32 %v857, %v859
    %v861 = vadd.f32 %v857, %v860
    %vm862 = vweird.f32 %v643
    %vm863 = vweird.f32 %v857
    %vm864 = vmor %vm862, %vm863
    %v865 = vsel %vm864, %v857, %v861
    %v866 = vand.u32 2147483647, %v643
    %vm867 = vcmp.eq.f32.partialorder %v866, 8.507059e+37
    %v868 = vand.u32 %v643, 2147483648
    %v869 = vor.u32 1.1754944e-38, %v868
    %v870 = vsel %vm867, %v869, %v865
    %v871 = vmul.f32 1.0, %v870
    %v872 = vrcp.pop %v644
    %v873 = vmul.f32 %v644, %v872
    %v874 = vsub.f32 1.0, %v873
    %v875 = vmul.f32 %v872, %v874
    %v876 = vadd.f32 %v872, %v875
    %vm877 = vweird.f32 %v644
    %vm878 = vweird.f32 %v872
    %vm879 = vmor %vm877, %vm878
    %v880 = vsel %vm879, %v872, %v876
    %v881 = vand.u32 2147483647, %v644
    %vm882 = vcmp.eq.f32.partialorder %v881, 8.507059e+37
    %v883 = vand.u32 %v644, 2147483648
    %v884 = vor.u32 1.1754944e-38, %v883
    %v885 = vsel %vm882, %v884, %v880
    %v886 = vmul.f32 1.0, %v885
    %v887 = vrcp.pop %v645
    %v888 = vmul.f32 %v645, %v887
    %v889 = vsub.f32 1.0, %v888
    %v890 = vmul.f32 %v887, %v889
    %v891 = vadd.f32 %v887, %v890
    %vm892 = vweird.f32 %v645
    %vm893 = vweird.f32 %v887
    %vm894 = vmor %vm892, %vm893
    %v895 = vsel %vm894, %v887, %v891
    %v896 = vand.u32 2147483647, %v645
    %vm897 = vcmp.eq.f32.partialorder %v896, 8.507059e+37
    %v898 = vand.u32 %v645, 2147483648
    %v899 = vor.u32 1.1754944e-38, %v898
    %v900 = vsel %vm897, %v899, %v895
    %v901 = vmul.f32 1.0, %v900
    %v902 = vrcp.pop %v646
    %v903 = vmul.f32 %v646, %v902
    %v904 = vsub.f32 1.0, %v903
    %v905 = vmul.f32 %v902, %v904
    %v906 = vadd.f32 %v902, %v905
    %vm907 = vweird.f32 %v646
    %vm908 = vweird.f32 %v902
    %vm909 = vmor %vm907, %vm908
    %v910 = vsel %vm909, %v902, %v906
    %v911 = vand.u32 2147483647, %v646
    %vm912 = vcmp.eq.f32.partialorder %v911, 8.507059e+37
    %v913 = vand.u32 %v646, 2147483648
    %v914 = vor.u32 1.1754944e-38, %v913
    %v915 = vsel %vm912, %v914, %v910
    %v916 = vmul.f32 1.0, %v915
    %v917 = vrcp.pop %v647
    %v918 = vmul.f32 %v647, %v917
    %v919 = vsub.f32 1.0, %v918
    %v920 = vmul.f32 %v917, %v919
    %v921 = vadd.f32 %v917, %v920
    %vm922 = vweird.f32 %v647
    %vm923 = vweird.f32 %v917
    %vm924 = vmor %vm922, %vm923
    %v925 = vsel %vm924, %v917, %v921
    %v926 = vand.u32 2147483647, %v647
    %vm927 = vcmp.eq.f32.partialorder %v926, 8.507059e+37
    %v928 = vand.u32 %v647, 2147483648
    %v929 = vor.u32 1.1754944e-38, %v928
    %v930 = vsel %vm927, %v929, %v925
    %v931 = vmul.f32 1.0, %v930
    %v932 = vrcp.pop %v648
    %v933 = vmul.f32 %v648, %v932
    %v934 = vsub.f32 1.0, %v933
    %v935 = vmul.f32 %v932, %v934
    %v936 = vadd.f32 %v932, %v935
    %vm937 = vweird.f32 %v648
    %vm938 = vweird.f32 %v932
    %vm939 = vmor %vm937, %vm938
    %v940 = vsel %vm939, %v932, %v936
    %v941 = vand.u32 2147483647, %v648
    %vm942 = vcmp.eq.f32.partialorder %v941, 8.507059e+37
    %v943 = vand.u32 %v648, 2147483648
    %v944 = vor.u32 1.1754944e-38, %v943
    %v945 = vsel %vm942, %v944, %v940
    %v946 = vmul.f32 1.0, %v945
    %v947 = vrcp.pop %v649
    %v948 = vmul.f32 %v649, %v947
    %v949 = vsub.f32 1.0, %v948
    %v950 = vmul.f32 %v947, %v949
    %v951 = vadd.f32 %v947, %v950
    %vm952 = vweird.f32 %v649
    %vm953 = vweird.f32 %v947
    %vm954 = vmor %vm952, %vm953
    %v955 = vsel %vm954, %v947, %v951
    %v956 = vand.u32 2147483647, %v649
    %vm957 = vcmp.eq.f32.partialorder %v956, 8.507059e+37
    %v958 = vand.u32 %v649, 2147483648
    %v959 = vor.u32 1.1754944e-38, %v958
    %v960 = vsel %vm957, %v959, %v955
    %v961 = vmul.f32 1.0, %v960
    %v962 = vrcp.pop %v650
    %v963 = vmul.f32 %v650, %v962
    %v964 = vsub.f32 1.0, %v963
    %v965 = vmul.f32 %v962, %v964
    %v966 = vadd.f32 %v962, %v965
    %vm967 = vweird.f32 %v650
    %vm968 = vweird.f32 %v962
    %vm969 = vmor %vm967, %vm968
    %v970 = vsel %vm969, %v962, %v966
    %v971 = vand.u32 2147483647, %v650
    %vm972 = vcmp.eq.f32.partialorder %v971, 8.507059e+37
    %v973 = vand.u32 %v650, 2147483648
    %v974 = vor.u32 1.1754944e-38, %v973
    %v975 = vsel %vm972, %v974, %v970
    %v976 = vmul.f32 1.0, %v975
    %v977 = vrcp.pop %v651
    %v978 = vmul.f32 %v651, %v977
    %v979 = vsub.f32 1.0, %v978
    %v980 = vmul.f32 %v977, %v979
    %v981 = vadd.f32 %v977, %v980
    %vm982 = vweird.f32 %v651
    %vm983 = vweird.f32 %v977
    %vm984 = vmor %vm982, %vm983
    %v985 = vsel %vm984, %v977, %v981
    %v986 = vand.u32 2147483647, %v651
    %vm987 = vcmp.eq.f32.partialorder %v986, 8.507059e+37
    %v988 = vand.u32 %v651, 2147483648
    %v989 = vor.u32 1.1754944e-38, %v988
    %v990 = vsel %vm987, %v989, %v985
    %v991 = vmul.f32 1.0, %v990
    %v992 = vrcp.pop %v652
    %v993 = vmul.f32 %v652, %v992
    %v994 = vsub.f32 1.0, %v993
    %v995 = vmul.f32 %v992, %v994
    %v996 = vadd.f32 %v992, %v995
    %vm997 = vweird.f32 %v652
    %vm998 = vweird.f32 %v992
    %vm999 = vmor %vm997, %vm998
    %v1000 = vsel %vm999, %v992, %v996
    %v1001 = vand.u32 2147483647, %v652
    %vm1002 = vcmp.eq.f32.partialorder %v1001, 8.507059e+37
    %v1003 = vand.u32 %v652, 2147483648
    %v1004 = vor.u32 1.1754944e-38, %v1003
    %v1005 = vsel %vm1002, %v1004, %v1000
    %v1006 = vmul.f32 1.0, %v1005
    %v1007 = vrcp.pop %v653
    %v1008 = vmul.f32 %v653, %v1007
    %v1009 = vsub.f32 1.0, %v1008
    %v1010 = vmul.f32 %v1007, %v1009
    %v1011 = vadd.f32 %v1007, %v1010
    %vm1012 = vweird.f32 %v653
    %vm1013 = vweird.f32 %v1007
    %vm1014 = vmor %vm1012, %vm1013
    %v1015 = vsel %vm1014, %v1007, %v1011
    %v1016 = vand.u32 2147483647, %v653
    %vm1017 = vcmp.eq.f32.partialorder %v1016, 8.507059e+37
    %v1018 = vand.u32 %v653, 2147483648
    %v1019 = vor.u32 1.1754944e-38, %v1018
    %v1020 = vsel %vm1017, %v1019, %v1015
    %v1021 = vmul.f32 1.0, %v1020
    %v1022 = vrcp.pop %v654
    %v1023 = vmul.f32 %v654, %v1022
    %v1024 = vsub.f32 1.0, %v1023
    %v1025 = vmul.f32 %v1022, %v1024
    %v1026 = vadd.f32 %v1022, %v1025
    %vm1027 = vweird.f32 %v654
    %vm1028 = vweird.f32 %v1022
    %vm1029 = vmor %vm1027, %vm1028
    %v1030 = vsel %vm1029, %v1022, %v1026
    %v1031 = vand.u32 2147483647, %v654
    %vm1032 = vcmp.eq.f32.partialorder %v1031, 8.507059e+37
    %v1033 = vand.u32 %v654, 2147483648
    %v1034 = vor.u32 1.1754944e-38, %v1033
    %v1035 = vsel %vm1032, %v1034, %v1030
    %v1036 = vmul.f32 1.0, %v1035
    %v1037 = vrcp.pop %v655
    %v1038 = vmul.f32 %v655, %v1037
    %v1039 = vsub.f32 1.0, %v1038
    %v1040 = vmul.f32 %v1037, %v1039
    %v1041 = vadd.f32 %v1037, %v1040
    %vm1042 = vweird.f32 %v655
    %vm1043 = vweird.f32 %v1037
    %vm1044 = vmor %vm1042, %vm1043
    %v1045 = vsel %vm1044, %v1037, %v1041
    %v1046 = vand.u32 2147483647, %v655
    %vm1047 = vcmp.eq.f32.partialorder %v1046, 8.507059e+37
    %v1048 = vand.u32 %v655, 2147483648
    %v1049 = vor.u32 1.1754944e-38, %v1048
    %v1050 = vsel %vm1047, %v1049, %v1045
    %v1051 = vmul.f32 1.0, %v1050
    %v1052 = vrcp.pop %v656
    %v1053 = vmul.f32 %v656, %v1052
    %v1054 = vsub.f32 1.0, %v1053
    %v1055 = vmul.f32 %v1052, %v1054
    %v1056 = vadd.f32 %v1052, %v1055
    %vm1057 = vweird.f32 %v656
    %vm1058 = vweird.f32 %v1052
    %vm1059 = vmor %vm1057, %vm1058
    %v1060 = vsel %vm1059, %v1052, %v1056
    %v1061 = vand.u32 2147483647, %v656
    %vm1062 = vcmp.eq.f32.partialorder %v1061, 8.507059e+37
    %v1063 = vand.u32 %v656, 2147483648
    %v1064 = vor.u32 1.1754944e-38, %v1063
    %v1065 = vsel %vm1062, %v1064, %v1060
    %v1066 = vmul.f32 1.0, %v1065
    %v1067 = vrcp.pop %v657
    %v1068 = vmul.f32 %v657, %v1067
    %v1069 = vsub.f32 1.0, %v1068
    %v1070 = vmul.f32 %v1067, %v1069
    %v1071 = vadd.f32 %v1067, %v1070
    %vm1072 = vweird.f32 %v657
    %vm1073 = vweird.f32 %v1067
    %vm1074 = vmor %vm1072, %vm1073
    %v1075 = vsel %vm1074, %v1067, %v1071
    %v1076 = vand.u32 2147483647, %v657
    %vm1077 = vcmp.eq.f32.partialorder %v1076, 8.507059e+37
    %v1078 = vand.u32 %v657, 2147483648
    %v1079 = vor.u32 1.1754944e-38, %v1078
    %v1080 = vsel %vm1077, %v1079, %v1075
    %v1081 = vmul.f32 1.0, %v1080
    %v1082 = vrcp.pop %v658
    %v1083 = vmul.f32 %v658, %v1082
    %v1084 = vsub.f32 1.0, %v1083
    %v1085 = vmul.f32 %v1082, %v1084
    %v1086 = vadd.f32 %v1082, %v1085
    %vm1087 = vweird.f32 %v658
    %vm1088 = vweird.f32 %v1082
    %vm1089 = vmor %vm1087, %vm1088
    %v1090 = vsel %vm1089, %v1082, %v1086
    %v1091 = vand.u32 2147483647, %v658
    %vm1092 = vcmp.eq.f32.partialorder %v1091, 8.507059e+37
    %v1093 = vand.u32 %v658, 2147483648
    %v1094 = vor.u32 1.1754944e-38, %v1093
    %v1095 = vsel %vm1092, %v1094, %v1090
    %v1096 = vmul.f32 1.0, %v1095
    %v1097 = vrcp.pop %v659
    %v1098 = vmul.f32 %v659, %v1097
    %v1099 = vsub.f32 1.0, %v1098
    %v1100 = vmul.f32 %v1097, %v1099
    %v1101 = vadd.f32 %v1097, %v1100
    %vm1102 = vweird.f32 %v659
    %vm1103 = vweird.f32 %v1097
    %vm1104 = vmor %vm1102, %vm1103
    %v1105 = vsel %vm1104, %v1097, %v1101
    %v1106 = vand.u32 2147483647, %v659
    %vm1107 = vcmp.eq.f32.partialorder %v1106, 8.507059e+37
    %v1108 = vand.u32 %v659, 2147483648
    %v1109 = vor.u32 1.1754944e-38, %v1108
    %v1110 = vsel %vm1107, %v1109, %v1105
    %v1111 = vmul.f32 1.0, %v1110
    %v1112 = vrcp.pop %v660
    %v1113 = vmul.f32 %v660, %v1112
    %v1114 = vsub.f32 1.0, %v1113
    %v1115 = vmul.f32 %v1112, %v1114
    %v1116 = vadd.f32 %v1112, %v1115
    %vm1117 = vweird.f32 %v660
    %vm1118 = vweird.f32 %v1112
    %vm1119 = vmor %vm1117, %vm1118
    %v1120 = vsel %vm1119, %v1112, %v1116
    %v1121 = vand.u32 2147483647, %v660
    %vm1122 = vcmp.eq.f32.partialorder %v1121, 8.507059e+37
    %v1123 = vand.u32 %v660, 2147483648
    %v1124 = vor.u32 1.1754944e-38, %v1123
    %v1125 = vsel %vm1122, %v1124, %v1120
    %v1126 = vmul.f32 1.0, %v1125
    %v1127 = vrcp.pop %v661
    %v1128 = vmul.f32 %v661, %v1127
    %v1129 = vsub.f32 1.0, %v1128
    %v1130 = vmul.f32 %v1127, %v1129
    %v1131 = vadd.f32 %v1127, %v1130
    %vm1132 = vweird.f32 %v661
    %vm1133 = vweird.f32 %v1127
    %vm1134 = vmor %vm1132, %vm1133
    %v1135 = vsel %vm1134, %v1127, %v1131
    %v1136 = vand.u32 2147483647, %v661
    %vm1137 = vcmp.eq.f32.partialorder %v1136, 8.507059e+37
    %v1138 = vand.u32 %v661, 2147483648
    %v1139 = vor.u32 1.1754944e-38, %v1138
    %v1140 = vsel %vm1137, %v1139, %v1135
    %v1141 = vmul.f32 1.0, %v1140
    %v1142 = vmul.f32 %v348, %v676
    %v1143 = vmul.f32 %v397, %v691
    %v1144 = vmul.f32 %v350, %v706
    %v1145 = vmul.f32 %v399, %v721
    %v1146 = vmul.f32 %v353, %v736
    %v1147 = vmul.f32 %v402, %v751
    %v1148 = vmul.f32 %v355, %v766
    %v1149 = vmul.f32 %v404, %v781
    %v1150 = vmul.f32 %v358, %v796
    %v1151 = vmul.f32 %v407, %v811
    %v1152 = vmul.f32 %v360, %v826
    %v1153 = vmul.f32 %v409, %v841
    %v1154 = vmul.f32 %v363, %v856
    %v1155 = vmul.f32 %v412, %v871
    %v1156 = vmul.f32 %v365, %v886
    %v1157 = vmul.f32 %v414, %v901
    %v1158 = vmul.f32 %v368, %v916
    %v1159 = vmul.f32 %v417, %v931
    %v1160 = vmul.f32 %v370, %v946
    %v1161 = vmul.f32 %v419, %v961
    %v1162 = vmul.f32 %v373, %v976
    %v1163 = vmul.f32 %v422, %v991
    %v1164 = vmul.f32 %v375, %v1006
    %v1165 = vmul.f32 %v424, %v1021
    %v1166 = vmul.f32 %v378, %v1036
    %v1167 = vmul.f32 %v427, %v1051
    %v1168 = vmul.f32 %v380, %v1066
    %v1169 = vmul.f32 %v429, %v1081
    %v1170 = vmul.f32 %v383, %v1096
    %v1171 = vmul.f32 %v432, %v1111
    %v1172 = vmul.f32 %v385, %v1126
    %v1173 = vmul.f32 %v434, %v1141
    %v1174 = vmul.f32 %v1142, %v446
    %v1175 = vmul.f32 %v1143, %v495
    %v1176 = vmul.f32 %v1144, %v448
    %v1177 = vmul.f32 %v1145, %v497
    %v1178 = vmul.f32 %v1146, %v451
    %v1179 = vmul.f32 %v1147, %v500
    %v1180 = vmul.f32 %v1148, %v453
    %v1181 = vmul.f32 %v1149, %v502
    %v1182 = vmul.f32 %v1150, %v456
    %v1183 = vmul.f32 %v1151, %v505
    %v1184 = vmul.f32 %v1152, %v458
    %v1185 = vmul.f32 %v1153, %v507
    %v1186 = vmul.f32 %v1154, %v461
    %v1187 = vmul.f32 %v1155, %v510
    %v1188 = vmul.f32 %v1156, %v463
    %v1189 = vmul.f32 %v1157, %v512
    %v1190 = vmul.f32 %v1158, %v466
    %v1191 = vmul.f32 %v1159, %v515
    %v1192 = vmul.f32 %v1160, %v468
    %v1193 = vmul.f32 %v1161, %v517
    %v1194 = vmul.f32 %v1162, %v471
    %v1195 = vmul.f32 %v1163, %v520
    %v1196 = vmul.f32 %v1164, %v473
    %v1197 = vmul.f32 %v1165, %v522
    %v1198 = vmul.f32 %v1166, %v476
    %v1199 = vmul.f32 %v1167, %v525
    %v1200 = vmul.f32 %v1168, %v478
    %v1201 = vmul.f32 %v1169, %v527
    %v1202 = vmul.f32 %v1170, %v481
    %v1203 = vmul.f32 %v1171, %v530
    %v1204 = vmul.f32 %v1172, %v483
    %v1205 = vmul.f32 %v1173, %v532
    %v1206 = vld [vmem:[#allocation2] sm:$0xff]
    %v1207 = vld [vmem:[#allocation2 + $0x8] sm:$0xff]
    %v1208 = vld [vmem:[#allocation2 + $0x10] sm:$0xff]
    %v1209 = vld [vmem:[#allocation2 + $0x18] sm:$0xff]
    %v1210 = vld [vmem:[#allocation2 + $0x20] sm:$0xff]
    %v1211 = vld [vmem:[#allocation2 + $0x28] sm:$0xff]
    %v1212 = vld [vmem:[#allocation2 + $0x30] sm:$0xff]
    %v1213 = vld [vmem:[#allocation2 + $0x38] sm:$0xff]
    %v1214 = vld [vmem:[#allocation2 + $0x40] sm:$0xff]
    %v1215 = vld [vmem:[#allocation2 + $0x48] sm:$0xff]
    %v1216 = vld [vmem:[#allocation2 + $0x50] sm:$0xff]
    %v1217 = vld [vmem:[#allocation2 + $0x58] sm:$0xff]
    %v1218 = vld [vmem:[#allocation2 + $0x60] sm:$0xff]
    %v1219 = vld [vmem:[#allocation2 + $0x68] sm:$0xff]
    %v1220 = vld [vmem:[#allocation2 + $0x70] sm:$0xff]
    %v1221 = vld [vmem:[#allocation2 + $0x78] sm:$0xff]
    %v1222 = vpack.c.bf16 %v1176, %v1174
    %v1223 = vpack.c.bf16 %v1177, %v1175
    %v1224 = vpack.c.bf16 %v1180, %v1178
    %v1225 = vpack.c.bf16 %v1181, %v1179
    %v1226 = vpack.c.bf16 %v1184, %v1182
    %v1227 = vpack.c.bf16 %v1185, %v1183
    %v1228 = vpack.c.bf16 %v1188, %v1186
    %v1229 = vpack.c.bf16 %v1189, %v1187
    %v1230 = vpack.c.bf16 %v1192, %v1190
    %v1231 = vpack.c.bf16 %v1193, %v1191
    %v1232 = vpack.c.bf16 %v1196, %v1194
    %v1233 = vpack.c.bf16 %v1197, %v1195
    %v1234 = vpack.c.bf16 %v1200, %v1198
    %v1235 = vpack.c.bf16 %v1201, %v1199
    %v1236 = vpack.c.bf16 %v1204, %v1202
    %v1237 = vpack.c.bf16 %v1205, %v1203
    %v1238 = vld [vmem:[#allocation8] sm:$0xf]
    %v1239 = vld [vmem:[#allocation8 + $0x4] sm:$0xf]
    %v1240 = vld [vmem:[#allocation8 + $0x8] sm:$0xf]
    %v1241 = vld [vmem:[#allocation8 + $0xc] sm:$0xf]
    %v1242 = vld [vmem:[#allocation8 + $0x10] sm:$0xf]
    %v1243 = vld [vmem:[#allocation8 + $0x14] sm:$0xf]
    %v1244 = vld [vmem:[#allocation8 + $0x18] sm:$0xf]
    %v1245 = vld [vmem:[#allocation8 + $0x1c] sm:$0xf]
    %v1246 = vld [vmem:[#allocation8 + $0x20] sm:$0xf]
    %v1247 = vld [vmem:[#allocation8 + $0x24] sm:$0xf]
    %v1248 = vld [vmem:[#allocation8 + $0x28] sm:$0xf]
    %v1249 = vld [vmem:[#allocation8 + $0x2c] sm:$0xf]
    %v1250 = vld [vmem:[#allocation8 + $0x30] sm:$0xf]
    %v1251 = vld [vmem:[#allocation8 + $0x34] sm:$0xf]
    %v1252 = vld [vmem:[#allocation8 + $0x38] sm:$0xf]
    %v1253 = vld [vmem:[#allocation8 + $0x3c] sm:$0xf]
    %v1254 = vld [vmem:[#allocation8 + $0x40] sm:$0xf]
    %v1255 = vld [vmem:[#allocation8 + $0x44] sm:$0xf]
    %v1256 = vld [vmem:[#allocation8 + $0x48] sm:$0xf]
    %v1257 = vld [vmem:[#allocation8 + $0x4c] sm:$0xf]
    %v1258 = vld [vmem:[#allocation8 + $0x50] sm:$0xf]
    %v1259 = vld [vmem:[#allocation8 + $0x54] sm:$0xf]
    %v1260 = vld [vmem:[#allocation8 + $0x58] sm:$0xf]
    %v1261 = vld [vmem:[#allocation8 + $0x5c] sm:$0xf]
    %v1262 = vld [vmem:[#allocation8 + $0x60] sm:$0xf]
    %v1263 = vld [vmem:[#allocation8 + $0x64] sm:$0xf]
    %v1264 = vld [vmem:[#allocation8 + $0x68] sm:$0xf]
    %v1265 = vld [vmem:[#allocation8 + $0x6c] sm:$0xf]
    %v1266 = vld [vmem:[#allocation8 + $0x70] sm:$0xf]
    %v1267 = vld [vmem:[#allocation8 + $0x74] sm:$0xf]
    %v1268 = vld [vmem:[#allocation8 + $0x78] sm:$0xf]
    %v1269 = vld [vmem:[#allocation8 + $0x7c] sm:$0xf]
    %v1302 = vunpack.c.l.b16 %v1238
    %v1303 = vunpack.c.l.b16 %v1239
    %v1304 = vunpack.c.l.b16 %v1240
    %v1305 = vunpack.c.l.b16 %v1241
    %v1306 = vunpack.c.l.b16 %v1242
    %v1307 = vunpack.c.l.b16 %v1243
    %v1308 = vunpack.c.l.b16 %v1244
    %v1309 = vunpack.c.l.b16 %v1245
    %v1310 = vunpack.c.l.b16 %v1246
    %v1311 = vunpack.c.l.b16 %v1247
    %v1312 = vunpack.c.l.b16 %v1248
    %v1313 = vunpack.c.l.b16 %v1249
    %v1314 = vunpack.c.l.b16 %v1250
    %v1315 = vunpack.c.l.b16 %v1251
    %v1316 = vunpack.c.l.b16 %v1252
    %v1317 = vunpack.c.l.b16 %v1253
    %v1318 = vunpack.c.l.b16 %v1254
    %v1319 = vunpack.c.l.b16 %v1255
    %v1320 = vunpack.c.l.b16 %v1256
    %v1321 = vunpack.c.l.b16 %v1257
    %v1322 = vunpack.c.l.b16 %v1258
    %v1323 = vunpack.c.l.b16 %v1259
    %v1324 = vunpack.c.l.b16 %v1260
    %v1325 = vunpack.c.l.b16 %v1261
    %v1326 = vunpack.c.l.b16 %v1262
    %v1327 = vunpack.c.l.b16 %v1263
    %v1328 = vunpack.c.l.b16 %v1264
    %v1329 = vunpack.c.l.b16 %v1265
    %v1330 = vunpack.c.l.b16 %v1266
    %v1331 = vunpack.c.l.b16 %v1267
    %v1332 = vunpack.c.l.b16 %v1268
    %v1333 = vunpack.c.l.b16 %v1269
    %v1334 = vpack.c.b16 %v1303, %v1302
    %v1335 = vpack.c.b16 %v1305, %v1304
    %v1336 = vpack.c.b16 %v1307, %v1306
    %v1337 = vpack.c.b16 %v1309, %v1308
    %v1338 = vpack.c.b16 %v1311, %v1310
    %v1339 = vpack.c.b16 %v1313, %v1312
    %v1340 = vpack.c.b16 %v1315, %v1314
    %v1341 = vpack.c.b16 %v1317, %v1316
    %v1342 = vpack.c.b16 %v1319, %v1318
    %v1343 = vpack.c.b16 %v1321, %v1320
    %v1344 = vpack.c.b16 %v1323, %v1322
    %v1345 = vpack.c.b16 %v1325, %v1324
    %v1346 = vpack.c.b16 %v1327, %v1326
    %v1347 = vpack.c.b16 %v1329, %v1328
    %v1348 = vpack.c.b16 %v1331, %v1330
    %v1349 = vpack.c.b16 %v1333, %v1332
    %1366 = vmatpush.bf16.msra.mxu0 %v1341
    %1367 = vmatpush.bf16.msra.mxu0 %v1340
    %1368 = vmatpush.bf16.msra.mxu0 %v1339
    %1369 = vmatpush.bf16.msra.mxu0 %v1338
    %1370 = vmatpush.bf16.msra.mxu0 %v1337
    %1371 = vmatpush.bf16.msra.mxu0 %v1336
    %1372 = vmatpush.bf16.msra.mxu0 %v1335
    %1373 = vmatpush.bf16.msra.mxu0 %v1334
    %1374 = vmatmul.bf16.gmra.mxu0 %v1222
    %v1375 = vpop.f32.mrf.mxu0
    %v1376 = vadd.f32 0.0, %v1375
    %v1377 = vpop.f32.mrf.mxu0
    %v1378 = vadd.f32 0.0, %v1377
    %1379 = vmatmul.bf16.gmra.mxu0 %v1224
    %v1380 = vpop.f32.mrf.mxu0
    %v1381 = vadd.f32 0.0, %v1380
    %v1382 = vpop.f32.mrf.mxu0
    %v1383 = vadd.f32 0.0, %v1382
    %1384 = vmatmul.bf16.gmra.mxu0 %v1226
    %v1385 = vpop.f32.mrf.mxu0
    %v1386 = vadd.f32 0.0, %v1385
    %v1387 = vpop.f32.mrf.mxu0
    %v1388 = vadd.f32 0.0, %v1387
    %1389 = vmatmul.bf16.gmra.mxu0 %v1228
    %v1390 = vpop.f32.mrf.mxu0
    %v1391 = vadd.f32 0.0, %v1390
    %v1392 = vpop.f32.mrf.mxu0
    %v1393 = vadd.f32 0.0, %v1392
    %1394 = vmatmul.bf16.gmra.mxu0 %v1230
    %v1395 = vpop.f32.mrf.mxu0
    %v1396 = vadd.f32 0.0, %v1395
    %v1397 = vpop.f32.mrf.mxu0
    %v1398 = vadd.f32 0.0, %v1397
    %1399 = vmatmul.bf16.gmra.mxu0 %v1232
    %v1400 = vpop.f32.mrf.mxu0
    %v1401 = vadd.f32 0.0, %v1400
    %v1402 = vpop.f32.mrf.mxu0
    %v1403 = vadd.f32 0.0, %v1402
    %1404 = vmatmul.bf16.gmra.mxu0 %v1234
    %v1405 = vpop.f32.mrf.mxu0
    %v1406 = vadd.f32 0.0, %v1405
    %v1407 = vpop.f32.mrf.mxu0
    %v1408 = vadd.f32 0.0, %v1407
    %1409 = vmatmul.bf16.gmra.mxu0 %v1236
    %v1410 = vpop.f32.mrf.mxu0
    %v1411 = vadd.f32 0.0, %v1410
    %v1412 = vpop.f32.mrf.mxu0
    %v1413 = vadd.f32 0.0, %v1412
    %1414 = vdwg.mxu0
    %1415 = vmatpush.bf16.msra.mxu0 %v1349
    %1416 = vmatpush.bf16.msra.mxu0 %v1348
    %1417 = vmatpush.bf16.msra.mxu0 %v1347
    %1418 = vmatpush.bf16.msra.mxu0 %v1346
    %1419 = vmatpush.bf16.msra.mxu0 %v1345
    %1420 = vmatpush.bf16.msra.mxu0 %v1344
    %1421 = vmatpush.bf16.msra.mxu0 %v1343
    %1422 = vmatpush.bf16.msra.mxu0 %v1342
    %1423 = vmatmul.bf16.gmra.mxu0 %v1223
    %v1424 = vpop.f32.mrf.mxu0
    %v1425 = vadd.f32 %v1376, %v1424
    %v1426 = vpop.f32.mrf.mxu0
    %v1427 = vadd.f32 %v1378, %v1426
    %1428 = vmatmul.bf16.gmra.mxu0 %v1225
    %v1429 = vpop.f32.mrf.mxu0
    %v1430 = vadd.f32 %v1381, %v1429
    %v1431 = vpop.f32.mrf.mxu0
    %v1432 = vadd.f32 %v1383, %v1431
    %1433 = vmatmul.bf16.gmra.mxu0 %v1227
    %v1434 = vpop.f32.mrf.mxu0
    %v1435 = vadd.f32 %v1386, %v1434
    %v1436 = vpop.f32.mrf.mxu0
    %v1437 = vadd.f32 %v1388, %v1436
    %1438 = vmatmul.bf16.gmra.mxu0 %v1229
    %v1439 = vpop.f32.mrf.mxu0
    %v1440 = vadd.f32 %v1391, %v1439
    %v1441 = vpop.f32.mrf.mxu0
    %v1442 = vadd.f32 %v1393, %v1441
    %1443 = vmatmul.bf16.gmra.mxu0 %v1231
    %v1444 = vpop.f32.mrf.mxu0
    %v1445 = vadd.f32 %v1396, %v1444
    %v1446 = vpop.f32.mrf.mxu0
    %v1447 = vadd.f32 %v1398, %v1446
    %1448 = vmatmul.bf16.gmra.mxu0 %v1233
    %v1449 = vpop.f32.mrf.mxu0
    %v1450 = vadd.f32 %v1401, %v1449
    %v1451 = vpop.f32.mrf.mxu0
    %v1452 = vadd.f32 %v1403, %v1451
    %1453 = vmatmul.bf16.gmra.mxu0 %v1235
    %v1454 = vpop.f32.mrf.mxu0
    %v1455 = vadd.f32 %v1406, %v1454
    %v1456 = vpop.f32.mrf.mxu0
    %v1457 = vadd.f32 %v1408, %v1456
    %1458 = vmatmul.bf16.gmra.mxu0 %v1237
    %v1459 = vpop.f32.mrf.mxu0
    %v1460 = vadd.f32 %v1411, %v1459
    %v1461 = vpop.f32.mrf.mxu0
    %v1462 = vadd.f32 %v1413, %v1461
    %1463 = vdwg.mxu0
    %v1464 = vadd.f32 %v1206, %v1425
    %v1465 = vadd.f32 %v1207, %v1427
    %v1466 = vadd.f32 %v1208, %v1430
    %v1467 = vadd.f32 %v1209, %v1432
    %v1468 = vadd.f32 %v1210, %v1435
    %v1469 = vadd.f32 %v1211, %v1437
    %v1470 = vadd.f32 %v1212, %v1440
    %v1471 = vadd.f32 %v1213, %v1442
    %v1472 = vadd.f32 %v1214, %v1445
    %v1473 = vadd.f32 %v1215, %v1447
    %v1474 = vadd.f32 %v1216, %v1450
    %v1475 = vadd.f32 %v1217, %v1452
    %v1476 = vadd.f32 %v1218, %v1455
    %v1477 = vadd.f32 %v1219, %v1457
    %v1478 = vadd.f32 %v1220, %v1460
    %v1479 = vadd.f32 %v1221, %v1462
    %1480 = vst [vmem:[#allocation2] sm:$0xff] %v1464
    %1481 = vst [vmem:[#allocation2 + $0x8] sm:$0xff] %v1465
    %1482 = vst [vmem:[#allocation2 + $0x10] sm:$0xff] %v1466
    %1483 = vst [vmem:[#allocation2 + $0x18] sm:$0xff] %v1467
    %1484 = vst [vmem:[#allocation2 + $0x20] sm:$0xff] %v1468
    %1485 = vst [vmem:[#allocation2 + $0x28] sm:$0xff] %v1469
    %1486 = vst [vmem:[#allocation2 + $0x30] sm:$0xff] %v1470
    %1487 = vst [vmem:[#allocation2 + $0x38] sm:$0xff] %v1471
    %1488 = vst [vmem:[#allocation2 + $0x40] sm:$0xff] %v1472
    %1489 = vst [vmem:[#allocation2 + $0x48] sm:$0xff] %v1473
    %1490 = vst [vmem:[#allocation2 + $0x50] sm:$0xff] %v1474
    %1491 = vst [vmem:[#allocation2 + $0x58] sm:$0xff] %v1475
    %1492 = vst [vmem:[#allocation2 + $0x60] sm:$0xff] %v1476
    %1493 = vst [vmem:[#allocation2 + $0x68] sm:$0xff] %v1477
    %1494 = vst [vmem:[#allocation2 + $0x70] sm:$0xff] %v1478
    %1495 = vst [vmem:[#allocation2 + $0x78] sm:$0xff] %v1479
    // Predicated region
    $region30: #{tpu_custom_call.1} parent=1 // pred_check
      %p1496 = pneg %p62
    $region31: #{tpu_custom_call.1} parent=1 // pred_check_branch
      %1498 = sbr.rel (%p1496) target = $region33
    $region32: #{tpu_custom_call.1} parent=1 // pred_region
      %v1499 = vld [vmem:[#allocation2] sm:$0xff]
      %v1500 = vld [vmem:[#allocation2 + $0x8] sm:$0xff]
      %v1501 = vld [vmem:[#allocation2 + $0x10] sm:$0xff]
      %v1502 = vld [vmem:[#allocation2 + $0x18] sm:$0xff]
      %v1503 = vld [vmem:[#allocation2 + $0x20] sm:$0xff]
      %v1504 = vld [vmem:[#allocation2 + $0x28] sm:$0xff]
      %v1505 = vld [vmem:[#allocation2 + $0x30] sm:$0xff]
      %v1506 = vld [vmem:[#allocation2 + $0x38] sm:$0xff]
      %v1507 = vld [vmem:[#allocation2 + $0x40] sm:$0xff]
      %v1508 = vld [vmem:[#allocation2 + $0x48] sm:$0xff]
      %v1509 = vld [vmem:[#allocation2 + $0x50] sm:$0xff]
      %v1510 = vld [vmem:[#allocation2 + $0x58] sm:$0xff]
      %v1511 = vld [vmem:[#allocation2 + $0x60] sm:$0xff]
      %v1512 = vld [vmem:[#allocation2 + $0x68] sm:$0xff]
      %v1513 = vld [vmem:[#allocation2 + $0x70] sm:$0xff]
      %v1514 = vld [vmem:[#allocation2 + $0x78] sm:$0xff]
      %1515 = vst [vmem:[#allocation9] sm:$0xff] %v1499
      %1516 = vst [vmem:[#allocation9 + $0x8] sm:$0xff] %v1500
      %1517 = vst [vmem:[#allocation9 + $0x10] sm:$0xff] %v1501
      %1518 = vst [vmem:[#allocation9 + $0x18] sm:$0xff] %v1502
      %1519 = vst [vmem:[#allocation9 + $0x20] sm:$0xff] %v1503
      %1520 = vst [vmem:[#allocation9 + $0x28] sm:$0xff] %v1504
      %1521 = vst [vmem:[#allocation9 + $0x30] sm:$0xff] %v1505
      %1522 = vst [vmem:[#allocation9 + $0x38] sm:$0xff] %v1506
      %1523 = vst [vmem:[#allocation9 + $0x40] sm:$0xff] %v1507
      %1524 = vst [vmem:[#allocation9 + $0x48] sm:$0xff] %v1508
      %1525 = vst [vmem:[#allocation9 + $0x50] sm:$0xff] %v1509
      %1526 = vst [vmem:[#allocation9 + $0x58] sm:$0xff] %v1510
      %1527 = vst [vmem:[#allocation9 + $0x60] sm:$0xff] %v1511
      %1528 = vst [vmem:[#allocation9 + $0x68] sm:$0xff] %v1512
      %1529 = vst [vmem:[#allocation9 + $0x70] sm:$0xff] %v1513
      %1530 = vst [vmem:[#allocation9 + $0x78] sm:$0xff] %v1514
    $region33: #{tpu_custom_call.1} parent=1 // pred_fallthru
      _
    // Predicated region
    $region34: #{tpu_custom_call.1} parent=1 // pred_check
      _
    $region35: #{tpu_custom_call.1} parent=1 // pred_check_branch
      %1532 = sbr.rel (0) target = $region37
    $region36: #{tpu_custom_call.1} parent=1 // pred_region
      %1534 = vsyncadd [#allocation5], 0
      %s1535 = sshll.u32 [#allocation9], 4
      %s1536 = int_to_ptr.vmem [resolvable:$true] %s1535
      %s1537 = sshll.u32 %s3, 4
      %s1538 = int_to_ptr.hbm [resolvable:$true] %s1537
      %1543 = dma.vmem_to_hbm [thread:$0]  %s1536, 2048, %s1538, [#allocation5], 128, 128, 8
    $region37: #{tpu_custom_call.1} parent=1 // pred_fallthru
      _
    // Predicated region
    $region38: #{tpu_custom_call.1} parent=1 // pred_check
      _
    $region39: #{tpu_custom_call.1} parent=1 // pred_check_branch
      %1545 = sbr.rel (0) target = $region41
    $region40: #{tpu_custom_call.1} parent=1 // pred_region
      %1547 = dma.done [#allocation5], 2048
    $region41: #{tpu_custom_call.1} parent=1 // pred_fallthru
      _
    %1548 = vsyncpa [#allocation4], 1
    %1549 = vsyncpa [#allocation7], 1
    %1550 = vsyncpa [#allocation5], 1

</llo_original>
